<compile_context>
chip_gen: v6e
topology: v6e:2x2x1
jax: 0.10.0
libtpu: 0.0.40
codegen_flags: <defaults>
</compile_context>

<pallas_src>
import functools

import jax
import jax.numpy as jnp
from jax.experimental import pallas as pl
from jax.experimental.pallas import tpu as pltpu


def _round_up(n, m):
    return ((n + m - 1) // m) * m


def _model_kernel(x_ref, wT_ref, b_ref, fcw_aT_ref, fcw_v2T_ref, bias_ref, o_ref):
    x = x_ref[...]                                   # (F, TB), F tiny (e.g. 4)
    F = x.shape[0]
    wT = wT_ref[...]                                 # (Hp, F)
    v2T = fcw_v2T_ref[...]                           # (C, F)

    # --- tiny-K contractions as unrolled rank-1 VPU updates (K == F) ---------
    pre = b_ref[...] + wT[:, 0:1] * x[0:1, :]        # (Hp, TB) = (x@w + b)^T
    lin = bias_ref[...] + v2T[:, 0:1] * x[0:1, :]    # (C, TB)  = folded v2 path
    for f in range(1, F):                            # unrolled at trace time
        xf = x[f:f + 1, :]                           # (1, TB)
        pre = pre + wT[:, f:f + 1] * xf
        lin = lin + v2T[:, f:f + 1] * xf

    # --- SineActivation + folded fc1: one dense MXU matmul (no class pad) ----
    v1 = jnp.sin(pre)                                # (Hp, TB)
    logits = lin + jnp.dot(fcw_aT_ref[...],
                           v1.astype(fcw_aT_ref.dtype),
                           preferred_element_type=jnp.float32)   # (C, TB)

    # --- Softmax over the class (sublane) axis; exact normalization ----------
    m = jnp.max(logits, axis=0, keepdims=True)       # (1, TB)
    e = jnp.exp(logits - m)                          # (C, TB)
    s = jnp.sum(e, axis=0, keepdims=True)            # (1, TB)
    o_ref[...] = (e / s).astype(o_ref.dtype)


@functools.partial(jax.jit, static_argnames=("block_b", "matmul_dtype"))
def model_forward(x, params, *, block_b=2048, matmul_dtype=jnp.bfloat16):
    """x: (B, in_features) float32. Returns softmax probs (B, n_classes)."""
    w, b, w0, b0 = params["w"], params["b"], params["w0"], params["b0"]
    fc_w, fc_b = params["fc_w"], params["fc_b"]

    B, F = x.shape
    Hm1 = w.shape[1]                      # hidden_dim - 1
    C = fc_w.shape[0]                     # n_classes

    LANE = 128
    Hp = _round_up(Hm1, LANE)
    f32 = jnp.float32

    # ---- fold the v2 (x@w0 + b0) path into the fc weights / bias ------------
    # logits^T = fcw_aT @ v1^T + (fcw_last @ w0^T) @ x^T + (fc_b + b0*fcw_last)
    fcw_last = fc_w[:, Hm1:].astype(f32)                        # (C, 1)
    fcw_aT = jnp.zeros((C, Hp), f32).at[:, :Hm1].set(fc_w[:, :Hm1].astype(f32))
    fcw_aT = fcw_aT.astype(matmul_dtype)                        # (C, Hp) matmul dtype
    fcw_v2T = fcw_last @ w0.T.astype(f32)                       # (C, F)
    bias_col = fc_b.reshape(C, 1).astype(f32) + b0.reshape(1, 1).astype(f32) * fcw_last

    # ---- SineActivation weights, transposed + zero-padded on hidden ---------
    wT_p = jnp.zeros((Hp, F), f32).at[:Hm1, :].set(w.T.astype(f32))
    b_col = jnp.zeros((Hp, 1), f32).at[:Hm1, 0].set(b.astype(f32))

    # ---- batch on the lane axis: TB multiple of 128, >=4 grid steps when ----
    # ---- the batch allows, capped at block_b (v5e/v7x VMEM-safe default) ----
    blk = max(LANE, (block_b // LANE) * LANE)
    Bp_min = _round_up(B, LANE)
    TB = min(blk, _round_up(pl.cdiv(Bp_min, 4), LANE))
    Bp = _round_up(B, TB)

    x_t = x.astype(f32).T                                       # (F, B), tiny
    if Bp != B:
        x_t = jnp.pad(x_t, ((0, 0), (0, Bp - B)))               # tiny (F, pad) copy

    const = lambda shape: pl.BlockSpec(shape, lambda i: (0, 0))  # VMEM-resident

    out_t = pl.pallas_call(
        _model_kernel,
        out_shape=jax.ShapeDtypeStruct((C, Bp), f32),
        grid=(Bp // TB,),
        in_specs=[
            pl.BlockSpec((F, TB), lambda i: (0, i)),   # x^T     (batch-tiled on lanes)
            const((Hp, F)),                            # w^T     (hidden zero-padded)
            const((Hp, 1)),                            # b       (column)
            const((C, Hp)),                            # fc weight on sin part
            const((C, F)),                             # folded v2 fc weight
            const((C, 1)),                             # folded bias (column)
        ],
        out_specs=pl.BlockSpec((C, TB), lambda i: (0, i)),
        compiler_params=pltpu.CompilerParams(
            dimension_semantics=("parallel",)),
    )(x_t, wT_p, b_col, fcw_aT, fcw_v2T, bias_col)

    # Back to the PyTorch (B, n_classes) layout; tiny (32 B/row) XLA epilogue.
    return out_t[:, :B].T


def init_params(key, in_features, hidden_dim, n_classes):
    ks = jax.random.split(key, 6)
    return {
        # Time2Vec params (torch.randn init)
        "w":  jax.random.normal(ks[0], (in_features, hidden_dim - 1), jnp.float32),
        "b":  jax.random.normal(ks[1], (hidden_dim - 1,), jnp.float32),
        "w0": jax.random.normal(ks[2], (in_features, 1), jnp.float32),
        "b0": jax.random.normal(ks[3], (1,), jnp.float32),
        # nn.Linear(hidden_dim, n_classes)
        "fc_w": jax.random.uniform(ks[4], (n_classes, hidden_dim), jnp.float32,
                                   minval=-1.0, maxval=1.0) / jnp.sqrt(hidden_dim),
        "fc_b": jax.random.uniform(ks[5], (n_classes,), jnp.float32,
                                   minval=-1.0, maxval=1.0) / jnp.sqrt(hidden_dim),
    }


def _reference(x, p):
    v1 = jnp.sin(x @ p["w"] + p["b"])
    v2 = x @ p["w0"] + p["b0"]
    h = jnp.concatenate([v1, v2], axis=1)
    logits = h @ p["fc_w"].T + p["fc_b"]
    return jax.nn.softmax(logits, axis=1)


if __name__ == "__main__":
    in_features, hidden_dim, n_classes = 4, 32, 8

    key = jax.random.PRNGKey(0)
    kx, kp, kx2 = jax.random.split(key, 3)
    params = init_params(kp, in_features, hidden_dim, n_classes)

    # --- small batch (single grid step), default bf16 MXU path ---------------
    x = jax.random.normal(kx, (8, in_features), jnp.float32)
    out = model_forward(x, params)
    jax.block_until_ready(out)
    ref = _reference(x, params)
    assert out.shape == (8, n_classes)
    # Exact divide in the softmax -> rows sum to 1 to f32 rounding.
    assert jnp.allclose(jnp.sum(out, axis=-1), 1.0, atol=1e-5)
    # bf16 matmul inputs (f32 accumulation) => small logit rounding error.
    assert jnp.allclose(out, ref, atol=2e-2, rtol=0.0), \
        float(jnp.max(jnp.abs(out - ref)))

    # --- same inputs through the exact f32 matmul path ------------------------
    out_f32 = model_forward(x, params, matmul_dtype=jnp.float32)
    jax.block_until_ready(out_f32)
    assert jnp.allclose(out_f32, ref, atol=1e-4, rtol=1e-4), \
        float(jnp.max(jnp.abs(out_f32 - ref)))

    # --- ragged batch exercising a multi-step grid + lane padding ------------
    x2 = jax.random.normal(kx2, (300, in_features), jnp.float32)
    out2 = model_forward(x2, params, block_b=128)
    jax.block_until_ready(out2)
    ref2 = _reference(x2, params)
    assert out2.shape == (300, n_classes)
    assert jnp.allclose(jnp.sum(out2, axis=-1), 1.0, atol=1e-5)
    assert jnp.allclose(out2, ref2, atol=2e-2, rtol=0.0), \
        float(jnp.max(jnp.abs(out2 - ref2)))

    print("KERNEL_OK")
</pallas_src>

<mosaic_0001>
module attributes {stable_mosaic.version = 11 : i64} {
  func.func @_model_kernel(%arg0: i32, %arg1: memref<4x128xf32, #tpu.memory_space<vmem>>, %arg2: memref<128x4xf32, #tpu.memory_space<vmem>>, %arg3: memref<128x1xf32, #tpu.memory_space<vmem>>, %arg4: memref<8x128xbf16, #tpu.memory_space<vmem>>, %arg5: memref<8x4xf32, #tpu.memory_space<vmem>>, %arg6: memref<8x1xf32, #tpu.memory_space<vmem>>, %arg7: memref<8x128xf32, #tpu.memory_space<vmem>>) attributes {dimension_semantics = [#tpu.dimension_semantics<parallel>], iteration_bounds = array<i64: 1>, scalar_prefetch = 0 : i64, scratch_operands = 0 : i64, tpu.core_type = #tpu.core_type<tc>, window_params = [{transform_indices = @transform_0, window_bounds = array<i64: 4, 128>}, {pipeline_mode = #tpu.pipeline_mode<synchronous>, transform_indices = @transform_1, window_bounds = array<i64: 128, 4>}, {pipeline_mode = #tpu.pipeline_mode<synchronous>, transform_indices = @transform_2, window_bounds = array<i64: 128, 1>}, {pipeline_mode = #tpu.pipeline_mode<synchronous>, transform_indices = @transform_3, window_bounds = array<i64: 8, 128>}, {pipeline_mode = #tpu.pipeline_mode<synchronous>, transform_indices = @transform_4, window_bounds = array<i64: 8, 4>}, {pipeline_mode = #tpu.pipeline_mode<synchronous>, transform_indices = @transform_5, window_bounds = array<i64: 8, 1>}, {transform_indices = @transform_6, window_bounds = array<i64: 8, 128>}]} {
    %c0 = arith.constant 0 : index
    %c0_0 = arith.constant 0 : index
    %0 = vector.load %arg1[%c0, %c0_0] : memref<4x128xf32, #tpu.memory_space<vmem>>, vector<4x128xf32>
    %c0_1 = arith.constant 0 : index
    %c0_2 = arith.constant 0 : index
    %1 = vector.load %arg2[%c0_1, %c0_2] : memref<128x4xf32, #tpu.memory_space<vmem>>, vector<128x4xf32>
    %c0_3 = arith.constant 0 : index
    %c0_4 = arith.constant 0 : index
    %2 = vector.load %arg5[%c0_3, %c0_4] : memref<8x4xf32, #tpu.memory_space<vmem>>, vector<8x4xf32>
    %c0_5 = arith.constant 0 : index
    %c0_6 = arith.constant 0 : index
    %3 = vector.load %arg3[%c0_5, %c0_6] : memref<128x1xf32, #tpu.memory_space<vmem>>, vector<128x1xf32>
    %4 = vector.extract_strided_slice %1 {offsets = [0, 0], sizes = [128, 1], strides = [1, 1]} : vector<128x4xf32> to vector<128x1xf32>
    %5 = vector.extract_strided_slice %0 {offsets = [0, 0], sizes = [1, 128], strides = [1, 1]} : vector<4x128xf32> to vector<1x128xf32>
    %6 = vector.broadcast %4 : vector<128x1xf32> to vector<128x128xf32>
    %7 = vector.broadcast %5 : vector<1x128xf32> to vector<128x128xf32>
    %8 = arith.mulf %6, %7 : vector<128x128xf32>
    %9 = vector.broadcast %3 : vector<128x1xf32> to vector<128x128xf32>
    %10 = arith.addf %9, %8 : vector<128x128xf32>
    %c0_7 = arith.constant 0 : index
    %c0_8 = arith.constant 0 : index
    %11 = vector.load %arg6[%c0_7, %c0_8] : memref<8x1xf32, #tpu.memory_space<vmem>>, vector<8x1xf32>
    %12 = vector.extract_strided_slice %2 {offsets = [0, 0], sizes = [8, 1], strides = [1, 1]} : vector<8x4xf32> to vector<8x1xf32>
    %13 = vector.extract_strided_slice %0 {offsets = [0, 0], sizes = [1, 128], strides = [1, 1]} : vector<4x128xf32> to vector<1x128xf32>
    %14 = vector.broadcast %12 : vector<8x1xf32> to vector<8x128xf32>
    %15 = vector.broadcast %13 : vector<1x128xf32> to vector<8x128xf32>
    %16 = arith.mulf %14, %15 : vector<8x128xf32>
    %17 = vector.broadcast %11 : vector<8x1xf32> to vector<8x128xf32>
    %18 = arith.addf %17, %16 : vector<8x128xf32>
    %19 = vector.extract_strided_slice %0 {offsets = [1, 0], sizes = [1, 128], strides = [1, 1]} : vector<4x128xf32> to vector<1x128xf32>
    %20 = vector.extract_strided_slice %1 {offsets = [0, 1], sizes = [128, 1], strides = [1, 1]} : vector<128x4xf32> to vector<128x1xf32>
    %21 = vector.broadcast %20 : vector<128x1xf32> to vector<128x128xf32>
    %22 = vector.broadcast %19 : vector<1x128xf32> to vector<128x128xf32>
    %23 = arith.mulf %21, %22 : vector<128x128xf32>
    %24 = arith.addf %10, %23 : vector<128x128xf32>
    %25 = vector.extract_strided_slice %2 {offsets = [0, 1], sizes = [8, 1], strides = [1, 1]} : vector<8x4xf32> to vector<8x1xf32>
    %26 = vector.broadcast %25 : vector<8x1xf32> to vector<8x128xf32>
    %27 = vector.broadcast %19 : vector<1x128xf32> to vector<8x128xf32>
    %28 = arith.mulf %26, %27 : vector<8x128xf32>
    %29 = arith.addf %18, %28 : vector<8x128xf32>
    %30 = vector.extract_strided_slice %0 {offsets = [2, 0], sizes = [1, 128], strides = [1, 1]} : vector<4x128xf32> to vector<1x128xf32>
    %31 = vector.extract_strided_slice %1 {offsets = [0, 2], sizes = [128, 1], strides = [1, 1]} : vector<128x4xf32> to vector<128x1xf32>
    %32 = vector.broadcast %31 : vector<128x1xf32> to vector<128x128xf32>
    %33 = vector.broadcast %30 : vector<1x128xf32> to vector<128x128xf32>
    %34 = arith.mulf %32, %33 : vector<128x128xf32>
    %35 = arith.addf %24, %34 : vector<128x128xf32>
    %36 = vector.extract_strided_slice %2 {offsets = [0, 2], sizes = [8, 1], strides = [1, 1]} : vector<8x4xf32> to vector<8x1xf32>
    %37 = vector.broadcast %36 : vector<8x1xf32> to vector<8x128xf32>
    %38 = vector.broadcast %30 : vector<1x128xf32> to vector<8x128xf32>
    %39 = arith.mulf %37, %38 : vector<8x128xf32>
    %40 = arith.addf %29, %39 : vector<8x128xf32>
    %41 = vector.extract_strided_slice %0 {offsets = [3, 0], sizes = [1, 128], strides = [1, 1]} : vector<4x128xf32> to vector<1x128xf32>
    %42 = vector.extract_strided_slice %1 {offsets = [0, 3], sizes = [128, 1], strides = [1, 1]} : vector<128x4xf32> to vector<128x1xf32>
    %43 = vector.broadcast %42 : vector<128x1xf32> to vector<128x128xf32>
    %44 = vector.broadcast %41 : vector<1x128xf32> to vector<128x128xf32>
    %45 = arith.mulf %43, %44 : vector<128x128xf32>
    %46 = arith.addf %35, %45 : vector<128x128xf32>
    %47 = vector.extract_strided_slice %2 {offsets = [0, 3], sizes = [8, 1], strides = [1, 1]} : vector<8x4xf32> to vector<8x1xf32>
    %48 = vector.broadcast %47 : vector<8x1xf32> to vector<8x128xf32>
    %49 = vector.broadcast %41 : vector<1x128xf32> to vector<8x128xf32>
    %50 = arith.mulf %48, %49 : vector<8x128xf32>
    %51 = arith.addf %40, %50 : vector<8x128xf32>
    %52 = math.sin %46 : vector<128x128xf32>
    %c0_9 = arith.constant 0 : index
    %c0_10 = arith.constant 0 : index
    %53 = vector.load %arg4[%c0_9, %c0_10] : memref<8x128xbf16, #tpu.memory_space<vmem>>, vector<8x128xbf16>
    %54 = arith.truncf %52 : vector<128x128xf32> to vector<128x128xbf16>
    %cst = arith.constant dense<0.000000e+00> : vector<8x128xf32>
    %55 = tpu.matmul %53, %54, %cst {dimension_numbers = #tpu.dot_dimension_numbers<[1], [0], [0], [1], [0, 0, 1, 1], [], []>} : vector<8x128xbf16>, vector<128x128xbf16>, vector<8x128xf32> -> vector<8x128xf32>
    %56 = arith.addf %51, %55 : vector<8x128xf32>
    %cst_11 = arith.constant dense<0xFF800000> : vector<128xf32>
    %57 = vector.multi_reduction <maximumf>, %56, %cst_11 [0] : vector<8x128xf32> to vector<128xf32>
    %58 = vector.shape_cast %57 : vector<128xf32> to vector<1x128xf32>
    %59 = vector.broadcast %58 : vector<1x128xf32> to vector<8x128xf32>
    %60 = arith.subf %56, %59 : vector<8x128xf32>
    %61 = math.exp %60 : vector<8x128xf32>
    %cst_12 = arith.constant dense<0.000000e+00> : vector<128xf32>
    %62 = vector.multi_reduction <add>, %61, %cst_12 [0] : vector<8x128xf32> to vector<128xf32>
    %63 = vector.shape_cast %62 : vector<128xf32> to vector<1x128xf32>
    %64 = vector.broadcast %63 : vector<1x128xf32> to vector<8x128xf32>
    %65 = arith.divf %61, %64 : vector<8x128xf32>
    %c0_13 = arith.constant 0 : index
    %c0_14 = arith.constant 0 : index
    %66 = vector.load %arg7[%c0_13, %c0_14] : memref<8x128xf32, #tpu.memory_space<vmem>>, vector<8x128xf32>
    tpu.vector_store %arg7[%c0_13, %c0_14], %65 {strides = array<i32>} : memref<8x128xf32, #tpu.memory_space<vmem>>, vector<8x128xf32>,
    return
  }
  func.func @transform_0(%arg0: i32) -> (i32, i32) {
    %c0_i32 = arith.constant 0 : i32
    %c0_i32_0 = arith.constant 0 : i32
    return %c0_i32, %arg0 : i32, i32
  }
  func.func @transform_1(%arg0: i32) -> (i32, i32) {
    %c0_i32 = arith.constant 0 : i32
    %c0_i32_0 = arith.constant 0 : i32
    %c0_i32_1 = arith.constant 0 : i32
    return %c0_i32, %c0_i32_0 : i32, i32
  }
  func.func @transform_2(%arg0: i32) -> (i32, i32) {
    %c0_i32 = arith.constant 0 : i32
    %c0_i32_0 = arith.constant 0 : i32
    %c0_i32_1 = arith.constant 0 : i32
    return %c0_i32, %c0_i32_0 : i32, i32
  }
  func.func @transform_3(%arg0: i32) -> (i32, i32) {
    %c0_i32 = arith.constant 0 : i32
    %c0_i32_0 = arith.constant 0 : i32
    %c0_i32_1 = arith.constant 0 : i32
    return %c0_i32, %c0_i32_0 : i32, i32
  }
  func.func @transform_4(%arg0: i32) -> (i32, i32) {
    %c0_i32 = arith.constant 0 : i32
    %c0_i32_0 = arith.constant 0 : i32
    %c0_i32_1 = arith.constant 0 : i32
    return %c0_i32, %c0_i32_0 : i32, i32
  }
  func.func @transform_5(%arg0: i32) -> (i32, i32) {
    %c0_i32 = arith.constant 0 : i32
    %c0_i32_0 = arith.constant 0 : i32
    %c0_i32_1 = arith.constant 0 : i32
    return %c0_i32, %c0_i32_0 : i32, i32
  }
  func.func @transform_6(%arg0: i32) -> (i32, i32) {
    %c0_i32 = arith.constant 0 : i32
    %c0_i32_0 = arith.constant 0 : i32
    return %c0_i32, %arg0 : i32, i32
  }
}

</mosaic_0001>

<llo_original>
// kernel: model_forward.1
$region0: #{model_forward.1}
  #allocation0 [shape = 'u32[]', space=smem, size = 0x4, offset = 0x4, fixed_abs, tag = 'smem constant byte address 0x4 - core index']
  #allocation1 [shape = 'u32[144,128]{1,0:T(1,128)}', space=vmem, size = 0x12000, scoped, tag = 'internal scratch']
  %s0 = inlined_call_operand.vmem [shape: f32[4,128], index: 0, kind: input, shape index: {}]
  %s1 = inlined_call_operand.vmem [shape: f32[128,4], index: 1, kind: input, shape index: {}]
  %s2 = inlined_call_operand.vmem [shape: f32[128,1], index: 2, kind: input, shape index: {}]
  %s3 = inlined_call_operand.vmem [shape: bf16[8,128], index: 3, kind: input, shape index: {}]
  %s4 = inlined_call_operand.vmem [shape: f32[8,4], index: 4, kind: input, shape index: {}]
  %s5 = inlined_call_operand.vmem [shape: f32[8,1], index: 5, kind: input, shape index: {}]
  %s6 = inlined_call_operand.vmem [shape: f32[8,128], index: 6, kind: output, shape index: {}]
  %s7 = sld [smem:[#allocation0]]
  $region34: #{model_forward.1} parent=0
    _
  %s9 = ssub.s32 1, %s7
  %s10 = scalar_select 0, %s9, %s7
  // Predicated region
  $region2: #{model_forward.1} parent=0 // pred_check
    _
  $region3: #{model_forward.1} parent=0 // pred_check_branch
    %12 = sbr.rel (0) target = $region5
  $region4: #{model_forward.1} parent=0 // pred_region
    _
  $region5: #{model_forward.1} parent=0 // pred_fallthru
    _
  // Predicated region
  $region6: #{model_forward.1} parent=0 // pred_check
    _
  $region7: #{model_forward.1} parent=0 // pred_check_branch
    %14 = sbr.rel (0) target = $region9
  $region8: #{model_forward.1} parent=0 // pred_region
    _
  $region9: #{model_forward.1} parent=0 // pred_fallthru
    _
  // Predicated region
  $region10: #{model_forward.1} parent=0 // pred_check
    _
  $region11: #{model_forward.1} parent=0 // pred_check_branch
    %16 = sbr.rel (0) target = $region13
  $region12: #{model_forward.1} parent=0 // pred_region
    _
  $region13: #{model_forward.1} parent=0 // pred_fallthru
    _
  // Predicated region
  $region14: #{model_forward.1} parent=0 // pred_check
    _
  $region15: #{model_forward.1} parent=0 // pred_check_branch
    %18 = sbr.rel (0) target = $region17
  $region16: #{model_forward.1} parent=0 // pred_region
    _
  $region17: #{model_forward.1} parent=0 // pred_fallthru
    _
  // Predicated region
  $region18: #{model_forward.1} parent=0 // pred_check
    _
  $region19: #{model_forward.1} parent=0 // pred_check_branch
    %20 = sbr.rel (0) target = $region21
  $region20: #{model_forward.1} parent=0 // pred_region
    _
  $region21: #{model_forward.1} parent=0 // pred_fallthru
    _
  // Predicated region
  $region22: #{model_forward.1} parent=0 // pred_check
    _
  $region23: #{model_forward.1} parent=0 // pred_check_branch
    %22 = sbr.rel (0) target = $region25
  $region24: #{model_forward.1} parent=0 // pred_region
    _
  $region25: #{model_forward.1} parent=0 // pred_fallthru
    _
  %v24 = vld [vmem:[%s0] sm:$0xf]
  %v25 = vld [vmem:[%s1] sm:$0xff]
  %v26 = vld [vmem:[%s1 + $0x8] sm:$0xff]
  %v27 = vld [vmem:[%s1 + $0x10] sm:$0xff]
  %v28 = vld [vmem:[%s1 + $0x18] sm:$0xff]
  %v29 = vld [vmem:[%s1 + $0x20] sm:$0xff]
  %v30 = vld [vmem:[%s1 + $0x28] sm:$0xff]
  %v31 = vld [vmem:[%s1 + $0x30] sm:$0xff]
  %v32 = vld [vmem:[%s1 + $0x38] sm:$0xff]
  %v33 = vld [vmem:[%s1 + $0x40] sm:$0xff]
  %v34 = vld [vmem:[%s1 + $0x48] sm:$0xff]
  %v35 = vld [vmem:[%s1 + $0x50] sm:$0xff]
  %v36 = vld [vmem:[%s1 + $0x58] sm:$0xff]
  %v37 = vld [vmem:[%s1 + $0x60] sm:$0xff]
  %v38 = vld [vmem:[%s1 + $0x68] sm:$0xff]
  %v39 = vld [vmem:[%s1 + $0x70] sm:$0xff]
  %v40 = vld [vmem:[%s1 + $0x78] sm:$0xff]
  %v41 = vld [vmem:[%s4] sm:$0xff]
  %v42 = vld [vmem:[%s2] sm:$0xff]
  %v43 = vld [vmem:[%s2 + $0x8] sm:$0xff]
  %v44 = vld [vmem:[%s2 + $0x10] sm:$0xff]
  %v45 = vld [vmem:[%s2 + $0x18] sm:$0xff]
  %v46 = vld [vmem:[%s2 + $0x20] sm:$0xff]
  %v47 = vld [vmem:[%s2 + $0x28] sm:$0xff]
  %v48 = vld [vmem:[%s2 + $0x30] sm:$0xff]
  %v49 = vld [vmem:[%s2 + $0x38] sm:$0xff]
  %v50 = vld [vmem:[%s2 + $0x40] sm:$0xff]
  %v51 = vld [vmem:[%s2 + $0x48] sm:$0xff]
  %v52 = vld [vmem:[%s2 + $0x50] sm:$0xff]
  %v53 = vld [vmem:[%s2 + $0x58] sm:$0xff]
  %v54 = vld [vmem:[%s2 + $0x60] sm:$0xff]
  %v55 = vld [vmem:[%s2 + $0x68] sm:$0xff]
  %v56 = vld [vmem:[%s2 + $0x70] sm:$0xff]
  %v57 = vld [vmem:[%s2 + $0x78] sm:$0xff]
  %59 = vset.pattern.permute.xlu0 0
  %60 = vperm.xlu0 %59, %v25
  %v61 = vpop.permute.xlu0 %60
  %64 = vset.pattern.permute.xlu0 0
  %65 = vperm.xlu0 %64, %v26
  %v66 = vpop.permute.xlu0 %65
  %69 = vset.pattern.permute.xlu0 0
  %70 = vperm.xlu0 %69, %v27
  %v71 = vpop.permute.xlu0 %70
  %74 = vset.pattern.permute.xlu0 0
  %75 = vperm.xlu0 %74, %v28
  %v76 = vpop.permute.xlu0 %75
  %79 = vset.pattern.permute.xlu0 0
  %80 = vperm.xlu0 %79, %v29
  %v81 = vpop.permute.xlu0 %80
  %84 = vset.pattern.permute.xlu0 0
  %85 = vperm.xlu0 %84, %v30
  %v86 = vpop.permute.xlu0 %85
  %89 = vset.pattern.permute.xlu0 0
  %90 = vperm.xlu0 %89, %v31
  %v91 = vpop.permute.xlu0 %90
  %94 = vset.pattern.permute.xlu0 0
  %95 = vperm.xlu0 %94, %v32
  %v96 = vpop.permute.xlu0 %95
  %99 = vset.pattern.permute.xlu0 0
  %100 = vperm.xlu0 %99, %v33
  %v101 = vpop.permute.xlu0 %100
  %104 = vset.pattern.permute.xlu0 0
  %105 = vperm.xlu0 %104, %v34
  %v106 = vpop.permute.xlu0 %105
  %109 = vset.pattern.permute.xlu0 0
  %110 = vperm.xlu0 %109, %v35
  %v111 = vpop.permute.xlu0 %110
  %114 = vset.pattern.permute.xlu0 0
  %115 = vperm.xlu0 %114, %v36
  %v116 = vpop.permute.xlu0 %115
  %119 = vset.pattern.permute.xlu0 0
  %120 = vperm.xlu0 %119, %v37
  %v121 = vpop.permute.xlu0 %120
  %124 = vset.pattern.permute.xlu0 0
  %125 = vperm.xlu0 %124, %v38
  %v126 = vpop.permute.xlu0 %125
  %129 = vset.pattern.permute.xlu0 0
  %130 = vperm.xlu0 %129, %v39
  %v131 = vpop.permute.xlu0 %130
  %134 = vset.pattern.permute.xlu0 0
  %135 = vperm.xlu0 %134, %v40
  %v136 = vpop.permute.xlu0 %135
  %v138 = vlaneseq
  %v139 = vshrl.u32 %v138, 7
  %v140 = vsub.s32 0, %v139
  %v141 = vrot.slane %v24, %v140
  %v142 = vmul.f32 %v61, %v141
  %v143 = vmul.f32 %v66, %v141
  %v144 = vmul.f32 %v71, %v141
  %v145 = vmul.f32 %v76, %v141
  %v146 = vmul.f32 %v81, %v141
  %v147 = vmul.f32 %v86, %v141
  %v148 = vmul.f32 %v91, %v141
  %v149 = vmul.f32 %v96, %v141
  %v150 = vmul.f32 %v101, %v141
  %v151 = vmul.f32 %v106, %v141
  %v152 = vmul.f32 %v111, %v141
  %v153 = vmul.f32 %v116, %v141
  %v154 = vmul.f32 %v121, %v141
  %v155 = vmul.f32 %v126, %v141
  %v156 = vmul.f32 %v131, %v141
  %v157 = vmul.f32 %v136, %v141
  %159 = vset.pattern.permute.xlu0 0
  %160 = vperm.xlu0 %159, %v42
  %v161 = vpop.permute.xlu0 %160
  %164 = vset.pattern.permute.xlu0 0
  %165 = vperm.xlu0 %164, %v43
  %v166 = vpop.permute.xlu0 %165
  %169 = vset.pattern.permute.xlu0 0
  %170 = vperm.xlu0 %169, %v44
  %v171 = vpop.permute.xlu0 %170
  %174 = vset.pattern.permute.xlu0 0
  %175 = vperm.xlu0 %174, %v45
  %v176 = vpop.permute.xlu0 %175
  %179 = vset.pattern.permute.xlu0 0
  %180 = vperm.xlu0 %179, %v46
  %v181 = vpop.permute.xlu0 %180
  %184 = vset.pattern.permute.xlu0 0
  %185 = vperm.xlu0 %184, %v47
  %v186 = vpop.permute.xlu0 %185
  %189 = vset.pattern.permute.xlu0 0
  %190 = vperm.xlu0 %189, %v48
  %v191 = vpop.permute.xlu0 %190
  %194 = vset.pattern.permute.xlu0 0
  %195 = vperm.xlu0 %194, %v49
  %v196 = vpop.permute.xlu0 %195
  %199 = vset.pattern.permute.xlu0 0
  %200 = vperm.xlu0 %199, %v50
  %v201 = vpop.permute.xlu0 %200
  %204 = vset.pattern.permute.xlu0 0
  %205 = vperm.xlu0 %204, %v51
  %v206 = vpop.permute.xlu0 %205
  %209 = vset.pattern.permute.xlu0 0
  %210 = vperm.xlu0 %209, %v52
  %v211 = vpop.permute.xlu0 %210
  %214 = vset.pattern.permute.xlu0 0
  %215 = vperm.xlu0 %214, %v53
  %v216 = vpop.permute.xlu0 %215
  %219 = vset.pattern.permute.xlu0 0
  %220 = vperm.xlu0 %219, %v54
  %v221 = vpop.permute.xlu0 %220
  %224 = vset.pattern.permute.xlu0 0
  %225 = vperm.xlu0 %224, %v55
  %v226 = vpop.permute.xlu0 %225
  %229 = vset.pattern.permute.xlu0 0
  %230 = vperm.xlu0 %229, %v56
  %v231 = vpop.permute.xlu0 %230
  %234 = vset.pattern.permute.xlu0 0
  %235 = vperm.xlu0 %234, %v57
  %v236 = vpop.permute.xlu0 %235
  %v238 = vadd.f32 %v161, %v142
  %v239 = vadd.f32 %v166, %v143
  %v240 = vadd.f32 %v171, %v144
  %v241 = vadd.f32 %v176, %v145
  %v242 = vadd.f32 %v181, %v146
  %v243 = vadd.f32 %v186, %v147
  %v244 = vadd.f32 %v191, %v148
  %v245 = vadd.f32 %v196, %v149
  %v246 = vadd.f32 %v201, %v150
  %v247 = vadd.f32 %v206, %v151
  %v248 = vadd.f32 %v211, %v152
  %v249 = vadd.f32 %v216, %v153
  %v250 = vadd.f32 %v221, %v154
  %v251 = vadd.f32 %v226, %v155
  %v252 = vadd.f32 %v231, %v156
  %v253 = vadd.f32 %v236, %v157
  %v254 = vld [vmem:[%s5] sm:$0xff]
  %256 = vset.pattern.permute.xlu0 0
  %257 = vperm.xlu0 %256, %v41
  %v258 = vpop.permute.xlu0 %257
  %v260 = vmul.f32 %v258, %v141
  %262 = vset.pattern.permute.xlu0 0
  %263 = vperm.xlu0 %262, %v254
  %v264 = vpop.permute.xlu0 %263
  %v266 = vadd.f32 %v264, %v260
  %267 = vset.pattern.permute.xlu0 1
  %268 = vperm.xlu0 %267, %v25
  %v269 = vpop.permute.xlu0 %268
  %271 = vset.pattern.permute.xlu0 1
  %272 = vperm.xlu0 %271, %v26
  %v273 = vpop.permute.xlu0 %272
  %275 = vset.pattern.permute.xlu0 1
  %276 = vperm.xlu0 %275, %v27
  %v277 = vpop.permute.xlu0 %276
  %279 = vset.pattern.permute.xlu0 1
  %280 = vperm.xlu0 %279, %v28
  %v281 = vpop.permute.xlu0 %280
  %283 = vset.pattern.permute.xlu0 1
  %284 = vperm.xlu0 %283, %v29
  %v285 = vpop.permute.xlu0 %284
  %287 = vset.pattern.permute.xlu0 1
  %288 = vperm.xlu0 %287, %v30
  %v289 = vpop.permute.xlu0 %288
  %291 = vset.pattern.permute.xlu0 1
  %292 = vperm.xlu0 %291, %v31
  %v293 = vpop.permute.xlu0 %292
  %295 = vset.pattern.permute.xlu0 1
  %296 = vperm.xlu0 %295, %v32
  %v297 = vpop.permute.xlu0 %296
  %299 = vset.pattern.permute.xlu0 1
  %300 = vperm.xlu0 %299, %v33
  %v301 = vpop.permute.xlu0 %300
  %303 = vset.pattern.permute.xlu0 1
  %304 = vperm.xlu0 %303, %v34
  %v305 = vpop.permute.xlu0 %304
  %307 = vset.pattern.permute.xlu0 1
  %308 = vperm.xlu0 %307, %v35
  %v309 = vpop.permute.xlu0 %308
  %311 = vset.pattern.permute.xlu0 1
  %312 = vperm.xlu0 %311, %v36
  %v313 = vpop.permute.xlu0 %312
  %315 = vset.pattern.permute.xlu0 1
  %316 = vperm.xlu0 %315, %v37
  %v317 = vpop.permute.xlu0 %316
  %319 = vset.pattern.permute.xlu0 1
  %320 = vperm.xlu0 %319, %v38
  %v321 = vpop.permute.xlu0 %320
  %323 = vset.pattern.permute.xlu0 1
  %324 = vperm.xlu0 %323, %v39
  %v325 = vpop.permute.xlu0 %324
  %327 = vset.pattern.permute.xlu0 1
  %328 = vperm.xlu0 %327, %v40
  %v329 = vpop.permute.xlu0 %328
  %v331 = vlaneseq
  %v332 = vshrl.u32 %v331, 7
  %v333 = vsub.s32 1, %v332
  %v334 = vrot.slane %v24, %v333
  %v335 = vmul.f32 %v269, %v334
  %v336 = vmul.f32 %v273, %v334
  %v337 = vmul.f32 %v277, %v334
  %v338 = vmul.f32 %v281, %v334
  %v339 = vmul.f32 %v285, %v334
  %v340 = vmul.f32 %v289, %v334
  %v341 = vmul.f32 %v293, %v334
  %v342 = vmul.f32 %v297, %v334
  %v343 = vmul.f32 %v301, %v334
  %v344 = vmul.f32 %v305, %v334
  %v345 = vmul.f32 %v309, %v334
  %v346 = vmul.f32 %v313, %v334
  %v347 = vmul.f32 %v317, %v334
  %v348 = vmul.f32 %v321, %v334
  %v349 = vmul.f32 %v325, %v334
  %v350 = vmul.f32 %v329, %v334
  %v351 = vadd.f32 %v238, %v335
  %v352 = vadd.f32 %v239, %v336
  %v353 = vadd.f32 %v240, %v337
  %v354 = vadd.f32 %v241, %v338
  %v355 = vadd.f32 %v242, %v339
  %v356 = vadd.f32 %v243, %v340
  %v357 = vadd.f32 %v244, %v341
  %v358 = vadd.f32 %v245, %v342
  %v359 = vadd.f32 %v246, %v343
  %v360 = vadd.f32 %v247, %v344
  %v361 = vadd.f32 %v248, %v345
  %v362 = vadd.f32 %v249, %v346
  %v363 = vadd.f32 %v250, %v347
  %v364 = vadd.f32 %v251, %v348
  %v365 = vadd.f32 %v252, %v349
  %v366 = vadd.f32 %v253, %v350
  %367 = vset.pattern.permute.xlu0 1
  %368 = vperm.xlu0 %367, %v41
  %v369 = vpop.permute.xlu0 %368
  %v371 = vmul.f32 %v369, %v334
  %v372 = vadd.f32 %v266, %v371
  %373 = vset.pattern.permute.xlu0 2
  %374 = vperm.xlu0 %373, %v25
  %v375 = vpop.permute.xlu0 %374
  %377 = vset.pattern.permute.xlu0 2
  %378 = vperm.xlu0 %377, %v26
  %v379 = vpop.permute.xlu0 %378
  %381 = vset.pattern.permute.xlu0 2
  %382 = vperm.xlu0 %381, %v27
  %v383 = vpop.permute.xlu0 %382
  %385 = vset.pattern.permute.xlu0 2
  %386 = vperm.xlu0 %385, %v28
  %v387 = vpop.permute.xlu0 %386
  %389 = vset.pattern.permute.xlu0 2
  %390 = vperm.xlu0 %389, %v29
  %v391 = vpop.permute.xlu0 %390
  %393 = vset.pattern.permute.xlu0 2
  %394 = vperm.xlu0 %393, %v30
  %v395 = vpop.permute.xlu0 %394
  %397 = vset.pattern.permute.xlu0 2
  %398 = vperm.xlu0 %397, %v31
  %v399 = vpop.permute.xlu0 %398
  %401 = vset.pattern.permute.xlu0 2
  %402 = vperm.xlu0 %401, %v32
  %v403 = vpop.permute.xlu0 %402
  %405 = vset.pattern.permute.xlu0 2
  %406 = vperm.xlu0 %405, %v33
  %v407 = vpop.permute.xlu0 %406
  %409 = vset.pattern.permute.xlu0 2
  %410 = vperm.xlu0 %409, %v34
  %v411 = vpop.permute.xlu0 %410
  %413 = vset.pattern.permute.xlu0 2
  %414 = vperm.xlu0 %413, %v35
  %v415 = vpop.permute.xlu0 %414
  %417 = vset.pattern.permute.xlu0 2
  %418 = vperm.xlu0 %417, %v36
  %v419 = vpop.permute.xlu0 %418
  %421 = vset.pattern.permute.xlu0 2
  %422 = vperm.xlu0 %421, %v37
  %v423 = vpop.permute.xlu0 %422
  %425 = vset.pattern.permute.xlu0 2
  %426 = vperm.xlu0 %425, %v38
  %v427 = vpop.permute.xlu0 %426
  %429 = vset.pattern.permute.xlu0 2
  %430 = vperm.xlu0 %429, %v39
  %v431 = vpop.permute.xlu0 %430
  %433 = vset.pattern.permute.xlu0 2
  %434 = vperm.xlu0 %433, %v40
  %v435 = vpop.permute.xlu0 %434
  %v437 = vlaneseq
  %v438 = vshrl.u32 %v437, 7
  %v439 = vsub.s32 2, %v438
  %v440 = vrot.slane %v24, %v439
  %v441 = vmul.f32 %v375, %v440
  %v442 = vmul.f32 %v379, %v440
  %v443 = vmul.f32 %v383, %v440
  %v444 = vmul.f32 %v387, %v440
  %v445 = vmul.f32 %v391, %v440
  %v446 = vmul.f32 %v395, %v440
  %v447 = vmul.f32 %v399, %v440
  %v448 = vmul.f32 %v403, %v440
  %v449 = vmul.f32 %v407, %v440
  %v450 = vmul.f32 %v411, %v440
  %v451 = vmul.f32 %v415, %v440
  %v452 = vmul.f32 %v419, %v440
  %v453 = vmul.f32 %v423, %v440
  %v454 = vmul.f32 %v427, %v440
  %v455 = vmul.f32 %v431, %v440
  %v456 = vmul.f32 %v435, %v440
  %v457 = vadd.f32 %v351, %v441
  %v458 = vadd.f32 %v352, %v442
  %v459 = vadd.f32 %v353, %v443
  %v460 = vadd.f32 %v354, %v444
  %v461 = vadd.f32 %v355, %v445
  %v462 = vadd.f32 %v356, %v446
  %v463 = vadd.f32 %v357, %v447
  %v464 = vadd.f32 %v358, %v448
  %v465 = vadd.f32 %v359, %v449
  %v466 = vadd.f32 %v360, %v450
  %v467 = vadd.f32 %v361, %v451
  %v468 = vadd.f32 %v362, %v452
  %v469 = vadd.f32 %v363, %v453
  %v470 = vadd.f32 %v364, %v454
  %v471 = vadd.f32 %v365, %v455
  %v472 = vadd.f32 %v366, %v456
  %473 = vset.pattern.permute.xlu0 2
  %474 = vperm.xlu0 %473, %v41
  %v475 = vpop.permute.xlu0 %474
  %v477 = vmul.f32 %v475, %v440
  %v478 = vadd.f32 %v372, %v477
  %479 = vset.pattern.permute.xlu0 3
  %480 = vperm.xlu0 %479, %v25
  %v481 = vpop.permute.xlu0 %480
  %483 = vset.pattern.permute.xlu0 3
  %484 = vperm.xlu0 %483, %v26
  %v485 = vpop.permute.xlu0 %484
  %487 = vset.pattern.permute.xlu0 3
  %488 = vperm.xlu0 %487, %v27
  %v489 = vpop.permute.xlu0 %488
  %491 = vset.pattern.permute.xlu0 3
  %492 = vperm.xlu0 %491, %v28
  %v493 = vpop.permute.xlu0 %492
  %495 = vset.pattern.permute.xlu0 3
  %496 = vperm.xlu0 %495, %v29
  %v497 = vpop.permute.xlu0 %496
  %499 = vset.pattern.permute.xlu0 3
  %500 = vperm.xlu0 %499, %v30
  %v501 = vpop.permute.xlu0 %500
  %503 = vset.pattern.permute.xlu0 3
  %504 = vperm.xlu0 %503, %v31
  %v505 = vpop.permute.xlu0 %504
  %507 = vset.pattern.permute.xlu0 3
  %508 = vperm.xlu0 %507, %v32
  %v509 = vpop.permute.xlu0 %508
  %511 = vset.pattern.permute.xlu0 3
  %512 = vperm.xlu0 %511, %v33
  %v513 = vpop.permute.xlu0 %512
  %515 = vset.pattern.permute.xlu0 3
  %516 = vperm.xlu0 %515, %v34
  %v517 = vpop.permute.xlu0 %516
  %519 = vset.pattern.permute.xlu0 3
  %520 = vperm.xlu0 %519, %v35
  %v521 = vpop.permute.xlu0 %520
  %523 = vset.pattern.permute.xlu0 3
  %524 = vperm.xlu0 %523, %v36
  %v525 = vpop.permute.xlu0 %524
  %527 = vset.pattern.permute.xlu0 3
  %528 = vperm.xlu0 %527, %v37
  %v529 = vpop.permute.xlu0 %528
  %531 = vset.pattern.permute.xlu0 3
  %532 = vperm.xlu0 %531, %v38
  %v533 = vpop.permute.xlu0 %532
  %535 = vset.pattern.permute.xlu0 3
  %536 = vperm.xlu0 %535, %v39
  %v537 = vpop.permute.xlu0 %536
  %539 = vset.pattern.permute.xlu0 3
  %540 = vperm.xlu0 %539, %v40
  %v541 = vpop.permute.xlu0 %540
  %v543 = vlaneseq
  %v544 = vshrl.u32 %v543, 7
  %v545 = vsub.s32 3, %v544
  %v546 = vrot.slane %v24, %v545
  %v547 = vmul.f32 %v481, %v546
  %v548 = vmul.f32 %v485, %v546
  %v549 = vmul.f32 %v489, %v546
  %v550 = vmul.f32 %v493, %v546
  %v551 = vmul.f32 %v497, %v546
  %v552 = vmul.f32 %v501, %v546
  %v553 = vmul.f32 %v505, %v546
  %v554 = vmul.f32 %v509, %v546
  %v555 = vmul.f32 %v513, %v546
  %v556 = vmul.f32 %v517, %v546
  %v557 = vmul.f32 %v521, %v546
  %v558 = vmul.f32 %v525, %v546
  %v559 = vmul.f32 %v529, %v546
  %v560 = vmul.f32 %v533, %v546
  %v561 = vmul.f32 %v537, %v546
  %v562 = vmul.f32 %v541, %v546
  %v563 = vadd.f32 %v457, %v547
  %v564 = vadd.f32 %v458, %v548
  %v565 = vadd.f32 %v459, %v549
  %v566 = vadd.f32 %v460, %v550
  %v567 = vadd.f32 %v461, %v551
  %v568 = vadd.f32 %v462, %v552
  %v569 = vadd.f32 %v463, %v553
  %v570 = vadd.f32 %v464, %v554
  %v571 = vadd.f32 %v465, %v555
  %v572 = vadd.f32 %v466, %v556
  %v573 = vadd.f32 %v467, %v557
  %v574 = vadd.f32 %v468, %v558
  %v575 = vadd.f32 %v469, %v559
  %v576 = vadd.f32 %v470, %v560
  %v577 = vadd.f32 %v471, %v561
  %v578 = vadd.f32 %v472, %v562
  %579 = vset.pattern.permute.xlu0 3
  %580 = vperm.xlu0 %579, %v41
  %v581 = vpop.permute.xlu0 %580
  %v583 = vmul.f32 %v581, %v546
  %v584 = vadd.f32 %v478, %v583
  %v585 = vand.u32 2147483647, %v563
  %vm586 = vcmp.le.f32.partialorder %v585, 0.7853982
  %vm587 = vcmp.lt.s32.totalorder %v563, 0
  %v588 = vand.u32 %v563, 2139095040
  %v589 = vshrl.u32 %v588, 23
  %v590 = vsub.s32 %v589, 127
  %v591 = vand.u32 2147483647, %v563
  %v592 = vand.u32 %v591, 8388607
  %v593 = vor.u32 %v592, 8388608
  %v594 = vsub.s32 0, %v593
  %v595 = vadd.s32 %v590, 1
  %vm596 = vcmp.gt.s32.totalorder %v595, 0
  %v597 = vsel %vm596, %v595, 0
  %v598 = vshrl.u32 %v597, 5
  %v599 = vand.u32 %v597, 31
  %v600 = vsub.s32 32, %v599
  %v601 = vshrl.u32 683565275, %v600
  %v602 = vshll.u32 683565275, %v599
  %v603 = vshrl.u32 2475754826, %v600
  %v604 = vor.u32 %v602, %v603
  %v605 = vshll.u32 2475754826, %v599
  %v606 = vshrl.u32 2131351028, %v600
  %v607 = vor.u32 %v605, %v606
  %v608 = vshll.u32 2131351028, %v599
  %v609 = vshrl.u32 2102212464, %v600
  %v610 = vor.u32 %v608, %v609
  %v611 = vshll.u32 2102212464, %v599
  %v612 = vshrl.u32 920167782, %v600
  %v613 = vor.u32 %v611, %v612
  %v614 = vshll.u32 920167782, %v599
  %v615 = vshrl.u32 1326507024, %v600
  %v616 = vor.u32 %v614, %v615
  %vm617 = vcmp.lt.s32.totalorder %v598, 1
  %vm618 = vcmp.lt.s32.totalorder %v598, 2
  %vm619 = vcmp.lt.s32.totalorder %v598, 3
  %vm620 = vcmp.lt.s32.totalorder %v598, 4
  %v621 = vsel %vm617, %v601, %v604
  %v622 = vsel %vm620, %v610, 2102212464
  %v623 = vsel %vm619, %v607, %v622
  %v624 = vsel %vm618, %v621, %v623
  %v625 = vsel %vm617, %v604, %v607
  %v626 = vsel %vm620, %v613, 920167782
  %v627 = vsel %vm619, %v610, %v626
  %v628 = vsel %vm618, %v625, %v627
  %v629 = vsel %vm617, %v607, %v610
  %v630 = vsel %vm620, %v616, 1326507024
  %v631 = vsel %vm619, %v613, %v630
  %v632 = vsel %vm618, %v629, %v631
  %v633 = vshll.u32 %v593, 8
  %v634 = vmul.u32.u64.compose %v633, %v632
  %v635 = vextract.low.u32 %v634
  %v636 = vextract.high.u32 %v634
  %v637 = vmul.u32.u64.compose %v633, %v628
  %v638 = vextract.low.u32 %v637
  %v639 = vextract.high.u32 %v637
  %v640 = vmul.u32 %v633, %v624
  %v641 = vadd.s32 %v636, %v638
  %vm642 = vc.u32 %v636, %v638
  %v643 = vadd.s32 %v639, 1
  %v644 = vsel %vm642, %v643, %v639
  %v645 = vadd.s32 %v640, %v644
  %v646 = vadd.s32 %v645, 536870912
  %v647 = vshrl.u32 %v646, 30
  %v648 = vshll.u32 %v647, 30
  %v649 = vsub.s32 %v645, %v648
  %vm650 = vcmp.lt.s32.totalorder %v649, 0
  %v651 = vsub.s32 0, %v649
  %v652 = vsel %vm650, %v651, %v649
  %v653 = vclz %v652
  %v654 = vsub.s32 %v653, 2
  %vm655 = vcmp.gt.s32.totalorder 0, %v654
  %v656 = vsel %vm655, 0, %v654
  %v657 = vsub.s32 32, %v656
  %v658 = vshll.u32 %v649, %v656
  %v659 = vshrl.u32 %v641, %v657
  %v660 = vor.u32 %v658, %v659
  %v661 = vsub.s32 4294967266, %v656
  %v662 = vadd.s32 %v661, 127
  %v663 = vshll.u32 %v662, 23
  %v664 = vor.u32 4788187, %v663
  %v665 = vand.u32 2147483647, %v664
  %v667 = vcvt.s32.f32 %v660
  %v668 = vmul.f32 %v667, %v665
  %v669 = vxor.u32 %v668, 2147483648
  %v670 = vsel %vm587, %v669, %v668
  %v671 = vsub.s32 4, %v647
  %v672 = vsel %vm587, %v671, %v647
  %v673 = vsel %vm586, %v563, %v670
  %v674 = vsel %vm586, 0, %v672
  %v675 = vcosq.f32.pop %v673
  %v676 = vsinq.f32.pop %v673
  %vm677 = vweird.f32 %v563
  %v678 = vadd.s32 %v674, 3
  %v679 = vand.u32 %v678, 3
  %vm680 = vcmp.lt.s32.totalorder %v679, 2
  %vm681 = vcmp.eq.s32.totalorder %v679, 0
  %v682 = vxor.u32 %v676, 2147483648
  %v683 = vsel %vm681, %v675, %v682
  %vm684 = vcmp.eq.s32.totalorder %v679, 2
  %v685 = vxor.u32 %v675, 2147483648
  %v686 = vsel %vm684, %v685, %v676
  %v687 = vsel %vm680, %v683, %v686
  %v688 = vsel %vm677, nan, %v687
  %v689 = vand.u32 2147483647, %v564
  %vm690 = vcmp.le.f32.partialorder %v689, 0.7853982
  %vm691 = vcmp.lt.s32.totalorder %v564, 0
  %v692 = vand.u32 %v564, 2139095040
  %v693 = vshrl.u32 %v692, 23
  %v694 = vsub.s32 %v693, 127
  %v695 = vand.u32 2147483647, %v564
  %v696 = vand.u32 %v695, 8388607
  %v697 = vor.u32 %v696, 8388608
  %v698 = vsub.s32 0, %v697
  %v699 = vadd.s32 %v694, 1
  %vm700 = vcmp.gt.s32.totalorder %v699, 0
  %v701 = vsel %vm700, %v699, 0
  %v702 = vshrl.u32 %v701, 5
  %v703 = vand.u32 %v701, 31
  %v704 = vsub.s32 32, %v703
  %v705 = vshrl.u32 683565275, %v704
  %v706 = vshll.u32 683565275, %v703
  %v707 = vshrl.u32 2475754826, %v704
  %v708 = vor.u32 %v706, %v707
  %v709 = vshll.u32 2475754826, %v703
  %v710 = vshrl.u32 2131351028, %v704
  %v711 = vor.u32 %v709, %v710
  %v712 = vshll.u32 2131351028, %v703
  %v713 = vshrl.u32 2102212464, %v704
  %v714 = vor.u32 %v712, %v713
  %v715 = vshll.u32 2102212464, %v703
  %v716 = vshrl.u32 920167782, %v704
  %v717 = vor.u32 %v715, %v716
  %v718 = vshll.u32 920167782, %v703
  %v719 = vshrl.u32 1326507024, %v704
  %v720 = vor.u32 %v718, %v719
  %vm721 = vcmp.lt.s32.totalorder %v702, 1
  %vm722 = vcmp.lt.s32.totalorder %v702, 2
  %vm723 = vcmp.lt.s32.totalorder %v702, 3
  %vm724 = vcmp.lt.s32.totalorder %v702, 4
  %v725 = vsel %vm721, %v705, %v708
  %v726 = vsel %vm724, %v714, 2102212464
  %v727 = vsel %vm723, %v711, %v726
  %v728 = vsel %vm722, %v725, %v727
  %v729 = vsel %vm721, %v708, %v711
  %v730 = vsel %vm724, %v717, 920167782
  %v731 = vsel %vm723, %v714, %v730
  %v732 = vsel %vm722, %v729, %v731
  %v733 = vsel %vm721, %v711, %v714
  %v734 = vsel %vm724, %v720, 1326507024
  %v735 = vsel %vm723, %v717, %v734
  %v736 = vsel %vm722, %v733, %v735
  %v737 = vshll.u32 %v697, 8
  %v738 = vmul.u32.u64.compose %v737, %v736
  %v739 = vextract.low.u32 %v738
  %v740 = vextract.high.u32 %v738
  %v741 = vmul.u32.u64.compose %v737, %v732
  %v742 = vextract.low.u32 %v741
  %v743 = vextract.high.u32 %v741
  %v744 = vmul.u32 %v737, %v728
  %v745 = vadd.s32 %v740, %v742
  %vm746 = vc.u32 %v740, %v742
  %v747 = vadd.s32 %v743, 1
  %v748 = vsel %vm746, %v747, %v743
  %v749 = vadd.s32 %v744, %v748
  %v750 = vadd.s32 %v749, 536870912
  %v751 = vshrl.u32 %v750, 30
  %v752 = vshll.u32 %v751, 30
  %v753 = vsub.s32 %v749, %v752
  %vm754 = vcmp.lt.s32.totalorder %v753, 0
  %v755 = vsub.s32 0, %v753
  %v756 = vsel %vm754, %v755, %v753
  %v757 = vclz %v756
  %v758 = vsub.s32 %v757, 2
  %vm759 = vcmp.gt.s32.totalorder 0, %v758
  %v760 = vsel %vm759, 0, %v758
  %v761 = vsub.s32 32, %v760
  %v762 = vshll.u32 %v753, %v760
  %v763 = vshrl.u32 %v745, %v761
  %v764 = vor.u32 %v762, %v763
  %v765 = vsub.s32 4294967266, %v760
  %v766 = vadd.s32 %v765, 127
  %v767 = vshll.u32 %v766, 23
  %v768 = vor.u32 4788187, %v767
  %v769 = vand.u32 2147483647, %v768
  %v771 = vcvt.s32.f32 %v764
  %v772 = vmul.f32 %v771, %v769
  %v773 = vxor.u32 %v772, 2147483648
  %v774 = vsel %vm691, %v773, %v772
  %v775 = vsub.s32 4, %v751
  %v776 = vsel %vm691, %v775, %v751
  %v777 = vsel %vm690, %v564, %v774
  %v778 = vsel %vm690, 0, %v776
  %v779 = vcosq.f32.pop %v777
  %v780 = vsinq.f32.pop %v777
  %vm781 = vweird.f32 %v564
  %v782 = vadd.s32 %v778, 3
  %v783 = vand.u32 %v782, 3
  %vm784 = vcmp.lt.s32.totalorder %v783, 2
  %vm785 = vcmp.eq.s32.totalorder %v783, 0
  %v786 = vxor.u32 %v780, 2147483648
  %v787 = vsel %vm785, %v779, %v786
  %vm788 = vcmp.eq.s32.totalorder %v783, 2
  %v789 = vxor.u32 %v779, 2147483648
  %v790 = vsel %vm788, %v789, %v780
  %v791 = vsel %vm784, %v787, %v790
  %v792 = vsel %vm781, nan, %v791
  %v793 = vand.u32 2147483647, %v565
  %vm794 = vcmp.le.f32.partialorder %v793, 0.7853982
  %vm795 = vcmp.lt.s32.totalorder %v565, 0
  %v796 = vand.u32 %v565, 2139095040
  %v797 = vshrl.u32 %v796, 23
  %v798 = vsub.s32 %v797, 127
  %v799 = vand.u32 2147483647, %v565
  %v800 = vand.u32 %v799, 8388607
  %v801 = vor.u32 %v800, 8388608
  %v802 = vsub.s32 0, %v801
  %v803 = vadd.s32 %v798, 1
  %vm804 = vcmp.gt.s32.totalorder %v803, 0
  %v805 = vsel %vm804, %v803, 0
  %v806 = vshrl.u32 %v805, 5
  %v807 = vand.u32 %v805, 31
  %v808 = vsub.s32 32, %v807
  %v809 = vshrl.u32 683565275, %v808
  %v810 = vshll.u32 683565275, %v807
  %v811 = vshrl.u32 2475754826, %v808
  %v812 = vor.u32 %v810, %v811
  %v813 = vshll.u32 2475754826, %v807
  %v814 = vshrl.u32 2131351028, %v808
  %v815 = vor.u32 %v813, %v814
  %v816 = vshll.u32 2131351028, %v807
  %v817 = vshrl.u32 2102212464, %v808
  %v818 = vor.u32 %v816, %v817
  %v819 = vshll.u32 2102212464, %v807
  %v820 = vshrl.u32 920167782, %v808
  %v821 = vor.u32 %v819, %v820
  %v822 = vshll.u32 920167782, %v807
  %v823 = vshrl.u32 1326507024, %v808
  %v824 = vor.u32 %v822, %v823
  %vm825 = vcmp.lt.s32.totalorder %v806, 1
  %vm826 = vcmp.lt.s32.totalorder %v806, 2
  %vm827 = vcmp.lt.s32.totalorder %v806, 3
  %vm828 = vcmp.lt.s32.totalorder %v806, 4
  %v829 = vsel %vm825, %v809, %v812
  %v830 = vsel %vm828, %v818, 2102212464
  %v831 = vsel %vm827, %v815, %v830
  %v832 = vsel %vm826, %v829, %v831
  %v833 = vsel %vm825, %v812, %v815
  %v834 = vsel %vm828, %v821, 920167782
  %v835 = vsel %vm827, %v818, %v834
  %v836 = vsel %vm826, %v833, %v835
  %v837 = vsel %vm825, %v815, %v818
  %v838 = vsel %vm828, %v824, 1326507024
  %v839 = vsel %vm827, %v821, %v838
  %v840 = vsel %vm826, %v837, %v839
  %v841 = vshll.u32 %v801, 8
  %v842 = vmul.u32.u64.compose %v841, %v840
  %v843 = vextract.low.u32 %v842
  %v844 = vextract.high.u32 %v842
  %v845 = vmul.u32.u64.compose %v841, %v836
  %v846 = vextract.low.u32 %v845
  %v847 = vextract.high.u32 %v845
  %v848 = vmul.u32 %v841, %v832
  %v849 = vadd.s32 %v844, %v846
  %vm850 = vc.u32 %v844, %v846
  %v851 = vadd.s32 %v847, 1
  %v852 = vsel %vm850, %v851, %v847
  %v853 = vadd.s32 %v848, %v852
  %v854 = vadd.s32 %v853, 536870912
  %v855 = vshrl.u32 %v854, 30
  %v856 = vshll.u32 %v855, 30
  %v857 = vsub.s32 %v853, %v856
  %vm858 = vcmp.lt.s32.totalorder %v857, 0
  %v859 = vsub.s32 0, %v857
  %v860 = vsel %vm858, %v859, %v857
  %v861 = vclz %v860
  %v862 = vsub.s32 %v861, 2
  %vm863 = vcmp.gt.s32.totalorder 0, %v862
  %v864 = vsel %vm863, 0, %v862
  %v865 = vsub.s32 32, %v864
  %v866 = vshll.u32 %v857, %v864
  %v867 = vshrl.u32 %v849, %v865
  %v868 = vor.u32 %v866, %v867
  %v869 = vsub.s32 4294967266, %v864
  %v870 = vadd.s32 %v869, 127
  %v871 = vshll.u32 %v870, 23
  %v872 = vor.u32 4788187, %v871
  %v873 = vand.u32 2147483647, %v872
  %v875 = vcvt.s32.f32 %v868
  %v876 = vmul.f32 %v875, %v873
  %v877 = vxor.u32 %v876, 2147483648
  %v878 = vsel %vm795, %v877, %v876
  %v879 = vsub.s32 4, %v855
  %v880 = vsel %vm795, %v879, %v855
  %v881 = vsel %vm794, %v565, %v878
  %v882 = vsel %vm794, 0, %v880
  %v883 = vcosq.f32.pop %v881
  %v884 = vsinq.f32.pop %v881
  %vm885 = vweird.f32 %v565
  %v886 = vadd.s32 %v882, 3
  %v887 = vand.u32 %v886, 3
  %vm888 = vcmp.lt.s32.totalorder %v887, 2
  %vm889 = vcmp.eq.s32.totalorder %v887, 0
  %v890 = vxor.u32 %v884, 2147483648
  %v891 = vsel %vm889, %v883, %v890
  %vm892 = vcmp.eq.s32.totalorder %v887, 2
  %v893 = vxor.u32 %v883, 2147483648
  %v894 = vsel %vm892, %v893, %v884
  %v895 = vsel %vm888, %v891, %v894
  %v896 = vsel %vm885, nan, %v895
  %v897 = vand.u32 2147483647, %v566
  %vm898 = vcmp.le.f32.partialorder %v897, 0.7853982
  %vm899 = vcmp.lt.s32.totalorder %v566, 0
  %v900 = vand.u32 %v566, 2139095040
  %v901 = vshrl.u32 %v900, 23
  %v902 = vsub.s32 %v901, 127
  %v903 = vand.u32 2147483647, %v566
  %v904 = vand.u32 %v903, 8388607
  %v905 = vor.u32 %v904, 8388608
  %v906 = vsub.s32 0, %v905
  %v907 = vadd.s32 %v902, 1
  %vm908 = vcmp.gt.s32.totalorder %v907, 0
  %v909 = vsel %vm908, %v907, 0
  %v910 = vshrl.u32 %v909, 5
  %v911 = vand.u32 %v909, 31
  %v912 = vsub.s32 32, %v911
  %v913 = vshrl.u32 683565275, %v912
  %v914 = vshll.u32 683565275, %v911
  %v915 = vshrl.u32 2475754826, %v912
  %v916 = vor.u32 %v914, %v915
  %v917 = vshll.u32 2475754826, %v911
  %v918 = vshrl.u32 2131351028, %v912
  %v919 = vor.u32 %v917, %v918
  %v920 = vshll.u32 2131351028, %v911
  %v921 = vshrl.u32 2102212464, %v912
  %v922 = vor.u32 %v920, %v921
  %v923 = vshll.u32 2102212464, %v911
  %v924 = vshrl.u32 920167782, %v912
  %v925 = vor.u32 %v923, %v924
  %v926 = vshll.u32 920167782, %v911
  %v927 = vshrl.u32 1326507024, %v912
  %v928 = vor.u32 %v926, %v927
  %vm929 = vcmp.lt.s32.totalorder %v910, 1
  %vm930 = vcmp.lt.s32.totalorder %v910, 2
  %vm931 = vcmp.lt.s32.totalorder %v910, 3
  %vm932 = vcmp.lt.s32.totalorder %v910, 4
  %v933 = vsel %vm929, %v913, %v916
  %v934 = vsel %vm932, %v922, 2102212464
  %v935 = vsel %vm931, %v919, %v934
  %v936 = vsel %vm930, %v933, %v935
  %v937 = vsel %vm929, %v916, %v919
  %v938 = vsel %vm932, %v925, 920167782
  %v939 = vsel %vm931, %v922, %v938
  %v940 = vsel %vm930, %v937, %v939
  %v941 = vsel %vm929, %v919, %v922
  %v942 = vsel %vm932, %v928, 1326507024
  %v943 = vsel %vm931, %v925, %v942
  %v944 = vsel %vm930, %v941, %v943
  %v945 = vshll.u32 %v905, 8
  %v946 = vmul.u32.u64.compose %v945, %v944
  %v947 = vextract.low.u32 %v946
  %v948 = vextract.high.u32 %v946
  %v949 = vmul.u32.u64.compose %v945, %v940
  %v950 = vextract.low.u32 %v949
  %v951 = vextract.high.u32 %v949
  %v952 = vmul.u32 %v945, %v936
  %v953 = vadd.s32 %v948, %v950
  %vm954 = vc.u32 %v948, %v950
  %v955 = vadd.s32 %v951, 1
  %v956 = vsel %vm954, %v955, %v951
  %v957 = vadd.s32 %v952, %v956
  %v958 = vadd.s32 %v957, 536870912
  %v959 = vshrl.u32 %v958, 30
  %v960 = vshll.u32 %v959, 30
  %v961 = vsub.s32 %v957, %v960
  %vm962 = vcmp.lt.s32.totalorder %v961, 0
  %v963 = vsub.s32 0, %v961
  %v964 = vsel %vm962, %v963, %v961
  %v965 = vclz %v964
  %v966 = vsub.s32 %v965, 2
  %vm967 = vcmp.gt.s32.totalorder 0, %v966
  %v968 = vsel %vm967, 0, %v966
  %v969 = vsub.s32 32, %v968
  %v970 = vshll.u32 %v961, %v968
  %v971 = vshrl.u32 %v953, %v969
  %v972 = vor.u32 %v970, %v971
  %v973 = vsub.s32 4294967266, %v968
  %v974 = vadd.s32 %v973, 127
  %v975 = vshll.u32 %v974, 23
  %v976 = vor.u32 4788187, %v975
  %v977 = vand.u32 2147483647, %v976
  %v979 = vcvt.s32.f32 %v972
  %v980 = vmul.f32 %v979, %v977
  %v981 = vxor.u32 %v980, 2147483648
  %v982 = vsel %vm899, %v981, %v980
  %v983 = vsub.s32 4, %v959
  %v984 = vsel %vm899, %v983, %v959
  %v985 = vsel %vm898, %v566, %v982
  %v986 = vsel %vm898, 0, %v984
  %v987 = vcosq.f32.pop %v985
  %v988 = vsinq.f32.pop %v985
  %vm989 = vweird.f32 %v566
  %v990 = vadd.s32 %v986, 3
  %v991 = vand.u32 %v990, 3
  %vm992 = vcmp.lt.s32.totalorder %v991, 2
  %vm993 = vcmp.eq.s32.totalorder %v991, 0
  %v994 = vxor.u32 %v988, 2147483648
  %v995 = vsel %vm993, %v987, %v994
  %vm996 = vcmp.eq.s32.totalorder %v991, 2
  %v997 = vxor.u32 %v987, 2147483648
  %v998 = vsel %vm996, %v997, %v988
  %v999 = vsel %vm992, %v995, %v998
  %v1000 = vsel %vm989, nan, %v999
  %v1001 = vand.u32 2147483647, %v567
  %vm1002 = vcmp.le.f32.partialorder %v1001, 0.7853982
  %vm1003 = vcmp.lt.s32.totalorder %v567, 0
  %v1004 = vand.u32 %v567, 2139095040
  %v1005 = vshrl.u32 %v1004, 23
  %v1006 = vsub.s32 %v1005, 127
  %v1007 = vand.u32 2147483647, %v567
  %v1008 = vand.u32 %v1007, 8388607
  %v1009 = vor.u32 %v1008, 8388608
  %v1010 = vsub.s32 0, %v1009
  %v1011 = vadd.s32 %v1006, 1
  %vm1012 = vcmp.gt.s32.totalorder %v1011, 0
  %v1013 = vsel %vm1012, %v1011, 0
  %v1014 = vshrl.u32 %v1013, 5
  %v1015 = vand.u32 %v1013, 31
  %v1016 = vsub.s32 32, %v1015
  %v1017 = vshrl.u32 683565275, %v1016
  %v1018 = vshll.u32 683565275, %v1015
  %v1019 = vshrl.u32 2475754826, %v1016
  %v1020 = vor.u32 %v1018, %v1019
  %v1021 = vshll.u32 2475754826, %v1015
  %v1022 = vshrl.u32 2131351028, %v1016
  %v1023 = vor.u32 %v1021, %v1022
  %v1024 = vshll.u32 2131351028, %v1015
  %v1025 = vshrl.u32 2102212464, %v1016
  %v1026 = vor.u32 %v1024, %v1025
  %v1027 = vshll.u32 2102212464, %v1015
  %v1028 = vshrl.u32 920167782, %v1016
  %v1029 = vor.u32 %v1027, %v1028
  %v1030 = vshll.u32 920167782, %v1015
  %v1031 = vshrl.u32 1326507024, %v1016
  %v1032 = vor.u32 %v1030, %v1031
  %vm1033 = vcmp.lt.s32.totalorder %v1014, 1
  %vm1034 = vcmp.lt.s32.totalorder %v1014, 2
  %vm1035 = vcmp.lt.s32.totalorder %v1014, 3
  %vm1036 = vcmp.lt.s32.totalorder %v1014, 4
  %v1037 = vsel %vm1033, %v1017, %v1020
  %v1038 = vsel %vm1036, %v1026, 2102212464
  %v1039 = vsel %vm1035, %v1023, %v1038
  %v1040 = vsel %vm1034, %v1037, %v1039
  %v1041 = vsel %vm1033, %v1020, %v1023
  %v1042 = vsel %vm1036, %v1029, 920167782
  %v1043 = vsel %vm1035, %v1026, %v1042
  %v1044 = vsel %vm1034, %v1041, %v1043
  %v1045 = vsel %vm1033, %v1023, %v1026
  %v1046 = vsel %vm1036, %v1032, 1326507024
  %v1047 = vsel %vm1035, %v1029, %v1046
  %v1048 = vsel %vm1034, %v1045, %v1047
  %v1049 = vshll.u32 %v1009, 8
  %v1050 = vmul.u32.u64.compose %v1049, %v1048
  %v1051 = vextract.low.u32 %v1050
  %v1052 = vextract.high.u32 %v1050
  %v1053 = vmul.u32.u64.compose %v1049, %v1044
  %v1054 = vextract.low.u32 %v1053
  %v1055 = vextract.high.u32 %v1053
  %v1056 = vmul.u32 %v1049, %v1040
  %v1057 = vadd.s32 %v1052, %v1054
  %vm1058 = vc.u32 %v1052, %v1054
  %v1059 = vadd.s32 %v1055, 1
  %v1060 = vsel %vm1058, %v1059, %v1055
  %v1061 = vadd.s32 %v1056, %v1060
  %v1062 = vadd.s32 %v1061, 536870912
  %v1063 = vshrl.u32 %v1062, 30
  %v1064 = vshll.u32 %v1063, 30
  %v1065 = vsub.s32 %v1061, %v1064
  %vm1066 = vcmp.lt.s32.totalorder %v1065, 0
  %v1067 = vsub.s32 0, %v1065
  %v1068 = vsel %vm1066, %v1067, %v1065
  %v1069 = vclz %v1068
  %v1070 = vsub.s32 %v1069, 2
  %vm1071 = vcmp.gt.s32.totalorder 0, %v1070
  %v1072 = vsel %vm1071, 0, %v1070
  %v1073 = vsub.s32 32, %v1072
  %v1074 = vshll.u32 %v1065, %v1072
  %v1075 = vshrl.u32 %v1057, %v1073
  %v1076 = vor.u32 %v1074, %v1075
  %v1077 = vsub.s32 4294967266, %v1072
  %v1078 = vadd.s32 %v1077, 127
  %v1079 = vshll.u32 %v1078, 23
  %v1080 = vor.u32 4788187, %v1079
  %v1081 = vand.u32 2147483647, %v1080
  %v1083 = vcvt.s32.f32 %v1076
  %v1084 = vmul.f32 %v1083, %v1081
  %v1085 = vxor.u32 %v1084, 2147483648
  %v1086 = vsel %vm1003, %v1085, %v1084
  %v1087 = vsub.s32 4, %v1063
  %v1088 = vsel %vm1003, %v1087, %v1063
  %v1089 = vsel %vm1002, %v567, %v1086
  %v1090 = vsel %vm1002, 0, %v1088
  %v1091 = vcosq.f32.pop %v1089
  %v1092 = vsinq.f32.pop %v1089
  %vm1093 = vweird.f32 %v567
  %v1094 = vadd.s32 %v1090, 3
  %v1095 = vand.u32 %v1094, 3
  %vm1096 = vcmp.lt.s32.totalorder %v1095, 2
  %vm1097 = vcmp.eq.s32.totalorder %v1095, 0
  %v1098 = vxor.u32 %v1092, 2147483648
  %v1099 = vsel %vm1097, %v1091, %v1098
  %vm1100 = vcmp.eq.s32.totalorder %v1095, 2
  %v1101 = vxor.u32 %v1091, 2147483648
  %v1102 = vsel %vm1100, %v1101, %v1092
  %v1103 = vsel %vm1096, %v1099, %v1102
  %v1104 = vsel %vm1093, nan, %v1103
  %v1105 = vand.u32 2147483647, %v568
  %vm1106 = vcmp.le.f32.partialorder %v1105, 0.7853982
  %vm1107 = vcmp.lt.s32.totalorder %v568, 0
  %v1108 = vand.u32 %v568, 2139095040
  %v1109 = vshrl.u32 %v1108, 23
  %v1110 = vsub.s32 %v1109, 127
  %v1111 = vand.u32 2147483647, %v568
  %v1112 = vand.u32 %v1111, 8388607
  %v1113 = vor.u32 %v1112, 8388608
  %v1114 = vsub.s32 0, %v1113
  %v1115 = vadd.s32 %v1110, 1
  %vm1116 = vcmp.gt.s32.totalorder %v1115, 0
  %v1117 = vsel %vm1116, %v1115, 0
  %v1118 = vshrl.u32 %v1117, 5
  %v1119 = vand.u32 %v1117, 31
  %v1120 = vsub.s32 32, %v1119
  %v1121 = vshrl.u32 683565275, %v1120
  %v1122 = vshll.u32 683565275, %v1119
  %v1123 = vshrl.u32 2475754826, %v1120
  %v1124 = vor.u32 %v1122, %v1123
  %v1125 = vshll.u32 2475754826, %v1119
  %v1126 = vshrl.u32 2131351028, %v1120
  %v1127 = vor.u32 %v1125, %v1126
  %v1128 = vshll.u32 2131351028, %v1119
  %v1129 = vshrl.u32 2102212464, %v1120
  %v1130 = vor.u32 %v1128, %v1129
  %v1131 = vshll.u32 2102212464, %v1119
  %v1132 = vshrl.u32 920167782, %v1120
  %v1133 = vor.u32 %v1131, %v1132
  %v1134 = vshll.u32 920167782, %v1119
  %v1135 = vshrl.u32 1326507024, %v1120
  %v1136 = vor.u32 %v1134, %v1135
  %vm1137 = vcmp.lt.s32.totalorder %v1118, 1
  %vm1138 = vcmp.lt.s32.totalorder %v1118, 2
  %vm1139 = vcmp.lt.s32.totalorder %v1118, 3
  %vm1140 = vcmp.lt.s32.totalorder %v1118, 4
  %v1141 = vsel %vm1137, %v1121, %v1124
  %v1142 = vsel %vm1140, %v1130, 2102212464
  %v1143 = vsel %vm1139, %v1127, %v1142
  %v1144 = vsel %vm1138, %v1141, %v1143
  %v1145 = vsel %vm1137, %v1124, %v1127
  %v1146 = vsel %vm1140, %v1133, 920167782
  %v1147 = vsel %vm1139, %v1130, %v1146
  %v1148 = vsel %vm1138, %v1145, %v1147
  %v1149 = vsel %vm1137, %v1127, %v1130
  %v1150 = vsel %vm1140, %v1136, 1326507024
  %v1151 = vsel %vm1139, %v1133, %v1150
  %v1152 = vsel %vm1138, %v1149, %v1151
  %v1153 = vshll.u32 %v1113, 8
  %v1154 = vmul.u32.u64.compose %v1153, %v1152
  %v1155 = vextract.low.u32 %v1154
  %v1156 = vextract.high.u32 %v1154
  %v1157 = vmul.u32.u64.compose %v1153, %v1148
  %v1158 = vextract.low.u32 %v1157
  %v1159 = vextract.high.u32 %v1157
  %v1160 = vmul.u32 %v1153, %v1144
  %v1161 = vadd.s32 %v1156, %v1158
  %vm1162 = vc.u32 %v1156, %v1158
  %v1163 = vadd.s32 %v1159, 1
  %v1164 = vsel %vm1162, %v1163, %v1159
  %v1165 = vadd.s32 %v1160, %v1164
  %v1166 = vadd.s32 %v1165, 536870912
  %v1167 = vshrl.u32 %v1166, 30
  %v1168 = vshll.u32 %v1167, 30
  %v1169 = vsub.s32 %v1165, %v1168
  %vm1170 = vcmp.lt.s32.totalorder %v1169, 0
  %v1171 = vsub.s32 0, %v1169
  %v1172 = vsel %vm1170, %v1171, %v1169
  %v1173 = vclz %v1172
  %v1174 = vsub.s32 %v1173, 2
  %vm1175 = vcmp.gt.s32.totalorder 0, %v1174
  %v1176 = vsel %vm1175, 0, %v1174
  %v1177 = vsub.s32 32, %v1176
  %v1178 = vshll.u32 %v1169, %v1176
  %v1179 = vshrl.u32 %v1161, %v1177
  %v1180 = vor.u32 %v1178, %v1179
  %v1181 = vsub.s32 4294967266, %v1176
  %v1182 = vadd.s32 %v1181, 127
  %v1183 = vshll.u32 %v1182, 23
  %v1184 = vor.u32 4788187, %v1183
  %v1185 = vand.u32 2147483647, %v1184
  %v1187 = vcvt.s32.f32 %v1180
  %v1188 = vmul.f32 %v1187, %v1185
  %v1189 = vxor.u32 %v1188, 2147483648
  %v1190 = vsel %vm1107, %v1189, %v1188
  %v1191 = vsub.s32 4, %v1167
  %v1192 = vsel %vm1107, %v1191, %v1167
  %v1193 = vsel %vm1106, %v568, %v1190
  %v1194 = vsel %vm1106, 0, %v1192
  %v1195 = vcosq.f32.pop %v1193
  %v1196 = vsinq.f32.pop %v1193
  %vm1197 = vweird.f32 %v568
  %v1198 = vadd.s32 %v1194, 3
  %v1199 = vand.u32 %v1198, 3
  %vm1200 = vcmp.lt.s32.totalorder %v1199, 2
  %vm1201 = vcmp.eq.s32.totalorder %v1199, 0
  %v1202 = vxor.u32 %v1196, 2147483648
  %v1203 = vsel %vm1201, %v1195, %v1202
  %vm1204 = vcmp.eq.s32.totalorder %v1199, 2
  %v1205 = vxor.u32 %v1195, 2147483648
  %v1206 = vsel %vm1204, %v1205, %v1196
  %v1207 = vsel %vm1200, %v1203, %v1206
  %v1208 = vsel %vm1197, nan, %v1207
  %v1209 = vand.u32 2147483647, %v569
  %vm1210 = vcmp.le.f32.partialorder %v1209, 0.7853982
  %vm1211 = vcmp.lt.s32.totalorder %v569, 0
  %v1212 = vand.u32 %v569, 2139095040
  %v1213 = vshrl.u32 %v1212, 23
  %v1214 = vsub.s32 %v1213, 127
  %v1215 = vand.u32 2147483647, %v569
  %v1216 = vand.u32 %v1215, 8388607
  %v1217 = vor.u32 %v1216, 8388608
  %v1218 = vsub.s32 0, %v1217
  %v1219 = vadd.s32 %v1214, 1
  %vm1220 = vcmp.gt.s32.totalorder %v1219, 0
  %v1221 = vsel %vm1220, %v1219, 0
  %v1222 = vshrl.u32 %v1221, 5
  %v1223 = vand.u32 %v1221, 31
  %v1224 = vsub.s32 32, %v1223
  %v1225 = vshrl.u32 683565275, %v1224
  %v1226 = vshll.u32 683565275, %v1223
  %v1227 = vshrl.u32 2475754826, %v1224
  %v1228 = vor.u32 %v1226, %v1227
  %v1229 = vshll.u32 2475754826, %v1223
  %v1230 = vshrl.u32 2131351028, %v1224
  %v1231 = vor.u32 %v1229, %v1230
  %v1232 = vshll.u32 2131351028, %v1223
  %v1233 = vshrl.u32 2102212464, %v1224
  %v1234 = vor.u32 %v1232, %v1233
  %v1235 = vshll.u32 2102212464, %v1223
  %v1236 = vshrl.u32 920167782, %v1224
  %v1237 = vor.u32 %v1235, %v1236
  %v1238 = vshll.u32 920167782, %v1223
  %v1239 = vshrl.u32 1326507024, %v1224
  %v1240 = vor.u32 %v1238, %v1239
  %vm1241 = vcmp.lt.s32.totalorder %v1222, 1
  %vm1242 = vcmp.lt.s32.totalorder %v1222, 2
  %vm1243 = vcmp.lt.s32.totalorder %v1222, 3
  %vm1244 = vcmp.lt.s32.totalorder %v1222, 4
  %v1245 = vsel %vm1241, %v1225, %v1228
  %v1246 = vsel %vm1244, %v1234, 2102212464
  %v1247 = vsel %vm1243, %v1231, %v1246
  %v1248 = vsel %vm1242, %v1245, %v1247
  %v1249 = vsel %vm1241, %v1228, %v1231
  %v1250 = vsel %vm1244, %v1237, 920167782
  %v1251 = vsel %vm1243, %v1234, %v1250
  %v1252 = vsel %vm1242, %v1249, %v1251
  %v1253 = vsel %vm1241, %v1231, %v1234
  %v1254 = vsel %vm1244, %v1240, 1326507024
  %v1255 = vsel %vm1243, %v1237, %v1254
  %v1256 = vsel %vm1242, %v1253, %v1255
  %v1257 = vshll.u32 %v1217, 8
  %v1258 = vmul.u32.u64.compose %v1257, %v1256
  %v1259 = vextract.low.u32 %v1258
  %v1260 = vextract.high.u32 %v1258
  %v1261 = vmul.u32.u64.compose %v1257, %v1252
  %v1262 = vextract.low.u32 %v1261
  %v1263 = vextract.high.u32 %v1261
  %v1264 = vmul.u32 %v1257, %v1248
  %v1265 = vadd.s32 %v1260, %v1262
  %vm1266 = vc.u32 %v1260, %v1262
  %v1267 = vadd.s32 %v1263, 1
  %v1268 = vsel %vm1266, %v1267, %v1263
  %v1269 = vadd.s32 %v1264, %v1268
  %v1270 = vadd.s32 %v1269, 536870912
  %v1271 = vshrl.u32 %v1270, 30
  %v1272 = vshll.u32 %v1271, 30
  %v1273 = vsub.s32 %v1269, %v1272
  %vm1274 = vcmp.lt.s32.totalorder %v1273, 0
  %v1275 = vsub.s32 0, %v1273
  %v1276 = vsel %vm1274, %v1275, %v1273
  %v1277 = vclz %v1276
  %v1278 = vsub.s32 %v1277, 2
  %vm1279 = vcmp.gt.s32.totalorder 0, %v1278
  %v1280 = vsel %vm1279, 0, %v1278
  %v1281 = vsub.s32 32, %v1280
  %v1282 = vshll.u32 %v1273, %v1280
  %v1283 = vshrl.u32 %v1265, %v1281
  %v1284 = vor.u32 %v1282, %v1283
  %v1285 = vsub.s32 4294967266, %v1280
  %v1286 = vadd.s32 %v1285, 127
  %v1287 = vshll.u32 %v1286, 23
  %v1288 = vor.u32 4788187, %v1287
  %v1289 = vand.u32 2147483647, %v1288
  %v1291 = vcvt.s32.f32 %v1284
  %v1292 = vmul.f32 %v1291, %v1289
  %v1293 = vxor.u32 %v1292, 2147483648
  %v1294 = vsel %vm1211, %v1293, %v1292
  %v1295 = vsub.s32 4, %v1271
  %v1296 = vsel %vm1211, %v1295, %v1271
  %v1297 = vsel %vm1210, %v569, %v1294
  %v1298 = vsel %vm1210, 0, %v1296
  %v1299 = vcosq.f32.pop %v1297
  %v1300 = vsinq.f32.pop %v1297
  %vm1301 = vweird.f32 %v569
  %v1302 = vadd.s32 %v1298, 3
  %v1303 = vand.u32 %v1302, 3
  %vm1304 = vcmp.lt.s32.totalorder %v1303, 2
  %vm1305 = vcmp.eq.s32.totalorder %v1303, 0
  %v1306 = vxor.u32 %v1300, 2147483648
  %v1307 = vsel %vm1305, %v1299, %v1306
  %vm1308 = vcmp.eq.s32.totalorder %v1303, 2
  %v1309 = vxor.u32 %v1299, 2147483648
  %v1310 = vsel %vm1308, %v1309, %v1300
  %v1311 = vsel %vm1304, %v1307, %v1310
  %v1312 = vsel %vm1301, nan, %v1311
  %v1313 = vand.u32 2147483647, %v570
  %vm1314 = vcmp.le.f32.partialorder %v1313, 0.7853982
  %vm1315 = vcmp.lt.s32.totalorder %v570, 0
  %v1316 = vand.u32 %v570, 2139095040
  %v1317 = vshrl.u32 %v1316, 23
  %v1318 = vsub.s32 %v1317, 127
  %v1319 = vand.u32 2147483647, %v570
  %v1320 = vand.u32 %v1319, 8388607
  %v1321 = vor.u32 %v1320, 8388608
  %v1322 = vsub.s32 0, %v1321
  %v1323 = vadd.s32 %v1318, 1
  %vm1324 = vcmp.gt.s32.totalorder %v1323, 0
  %v1325 = vsel %vm1324, %v1323, 0
  %v1326 = vshrl.u32 %v1325, 5
  %v1327 = vand.u32 %v1325, 31
  %v1328 = vsub.s32 32, %v1327
  %v1329 = vshrl.u32 683565275, %v1328
  %v1330 = vshll.u32 683565275, %v1327
  %v1331 = vshrl.u32 2475754826, %v1328
  %v1332 = vor.u32 %v1330, %v1331
  %v1333 = vshll.u32 2475754826, %v1327
  %v1334 = vshrl.u32 2131351028, %v1328
  %v1335 = vor.u32 %v1333, %v1334
  %v1336 = vshll.u32 2131351028, %v1327
  %v1337 = vshrl.u32 2102212464, %v1328
  %v1338 = vor.u32 %v1336, %v1337
  %v1339 = vshll.u32 2102212464, %v1327
  %v1340 = vshrl.u32 920167782, %v1328
  %v1341 = vor.u32 %v1339, %v1340
  %v1342 = vshll.u32 920167782, %v1327
  %v1343 = vshrl.u32 1326507024, %v1328
  %v1344 = vor.u32 %v1342, %v1343
  %vm1345 = vcmp.lt.s32.totalorder %v1326, 1
  %vm1346 = vcmp.lt.s32.totalorder %v1326, 2
  %vm1347 = vcmp.lt.s32.totalorder %v1326, 3
  %vm1348 = vcmp.lt.s32.totalorder %v1326, 4
  %v1349 = vsel %vm1345, %v1329, %v1332
  %v1350 = vsel %vm1348, %v1338, 2102212464
  %v1351 = vsel %vm1347, %v1335, %v1350
  %v1352 = vsel %vm1346, %v1349, %v1351
  %v1353 = vsel %vm1345, %v1332, %v1335
  %v1354 = vsel %vm1348, %v1341, 920167782
  %v1355 = vsel %vm1347, %v1338, %v1354
  %v1356 = vsel %vm1346, %v1353, %v1355
  %v1357 = vsel %vm1345, %v1335, %v1338
  %v1358 = vsel %vm1348, %v1344, 1326507024
  %v1359 = vsel %vm1347, %v1341, %v1358
  %v1360 = vsel %vm1346, %v1357, %v1359
  %v1361 = vshll.u32 %v1321, 8
  %v1362 = vmul.u32.u64.compose %v1361, %v1360
  %v1363 = vextract.low.u32 %v1362
  %v1364 = vextract.high.u32 %v1362
  %v1365 = vmul.u32.u64.compose %v1361, %v1356
  %v1366 = vextract.low.u32 %v1365
  %v1367 = vextract.high.u32 %v1365
  %v1368 = vmul.u32 %v1361, %v1352
  %v1369 = vadd.s32 %v1364, %v1366
  %vm1370 = vc.u32 %v1364, %v1366
  %v1371 = vadd.s32 %v1367, 1
  %v1372 = vsel %vm1370, %v1371, %v1367
  %v1373 = vadd.s32 %v1368, %v1372
  %v1374 = vadd.s32 %v1373, 536870912
  %v1375 = vshrl.u32 %v1374, 30
  %v1376 = vshll.u32 %v1375, 30
  %v1377 = vsub.s32 %v1373, %v1376
  %vm1378 = vcmp.lt.s32.totalorder %v1377, 0
  %v1379 = vsub.s32 0, %v1377
  %v1380 = vsel %vm1378, %v1379, %v1377
  %v1381 = vclz %v1380
  %v1382 = vsub.s32 %v1381, 2
  %vm1383 = vcmp.gt.s32.totalorder 0, %v1382
  %v1384 = vsel %vm1383, 0, %v1382
  %v1385 = vsub.s32 32, %v1384
  %v1386 = vshll.u32 %v1377, %v1384
  %v1387 = vshrl.u32 %v1369, %v1385
  %v1388 = vor.u32 %v1386, %v1387
  %v1389 = vsub.s32 4294967266, %v1384
  %v1390 = vadd.s32 %v1389, 127
  %v1391 = vshll.u32 %v1390, 23
  %v1392 = vor.u32 4788187, %v1391
  %v1393 = vand.u32 2147483647, %v1392
  %v1395 = vcvt.s32.f32 %v1388
  %v1396 = vmul.f32 %v1395, %v1393
  %v1397 = vxor.u32 %v1396, 2147483648
  %v1398 = vsel %vm1315, %v1397, %v1396
  %v1399 = vsub.s32 4, %v1375
  %v1400 = vsel %vm1315, %v1399, %v1375
  %v1401 = vsel %vm1314, %v570, %v1398
  %v1402 = vsel %vm1314, 0, %v1400
  %v1403 = vcosq.f32.pop %v1401
  %v1404 = vsinq.f32.pop %v1401
  %vm1405 = vweird.f32 %v570
  %v1406 = vadd.s32 %v1402, 3
  %v1407 = vand.u32 %v1406, 3
  %vm1408 = vcmp.lt.s32.totalorder %v1407, 2
  %vm1409 = vcmp.eq.s32.totalorder %v1407, 0
  %v1410 = vxor.u32 %v1404, 2147483648
  %v1411 = vsel %vm1409, %v1403, %v1410
  %vm1412 = vcmp.eq.s32.totalorder %v1407, 2
  %v1413 = vxor.u32 %v1403, 2147483648
  %v1414 = vsel %vm1412, %v1413, %v1404
  %v1415 = vsel %vm1408, %v1411, %v1414
  %v1416 = vsel %vm1405, nan, %v1415
  %v1417 = vand.u32 2147483647, %v571
  %vm1418 = vcmp.le.f32.partialorder %v1417, 0.7853982
  %vm1419 = vcmp.lt.s32.totalorder %v571, 0
  %v1420 = vand.u32 %v571, 2139095040
  %v1421 = vshrl.u32 %v1420, 23
  %v1422 = vsub.s32 %v1421, 127
  %v1423 = vand.u32 2147483647, %v571
  %v1424 = vand.u32 %v1423, 8388607
  %v1425 = vor.u32 %v1424, 8388608
  %v1426 = vsub.s32 0, %v1425
  %v1427 = vadd.s32 %v1422, 1
  %vm1428 = vcmp.gt.s32.totalorder %v1427, 0
  %v1429 = vsel %vm1428, %v1427, 0
  %v1430 = vshrl.u32 %v1429, 5
  %v1431 = vand.u32 %v1429, 31
  %v1432 = vsub.s32 32, %v1431
  %v1433 = vshrl.u32 683565275, %v1432
  %v1434 = vshll.u32 683565275, %v1431
  %v1435 = vshrl.u32 2475754826, %v1432
  %v1436 = vor.u32 %v1434, %v1435
  %v1437 = vshll.u32 2475754826, %v1431
  %v1438 = vshrl.u32 2131351028, %v1432
  %v1439 = vor.u32 %v1437, %v1438
  %v1440 = vshll.u32 2131351028, %v1431
  %v1441 = vshrl.u32 2102212464, %v1432
  %v1442 = vor.u32 %v1440, %v1441
  %v1443 = vshll.u32 2102212464, %v1431
  %v1444 = vshrl.u32 920167782, %v1432
  %v1445 = vor.u32 %v1443, %v1444
  %v1446 = vshll.u32 920167782, %v1431
  %v1447 = vshrl.u32 1326507024, %v1432
  %v1448 = vor.u32 %v1446, %v1447
  %vm1449 = vcmp.lt.s32.totalorder %v1430, 1
  %vm1450 = vcmp.lt.s32.totalorder %v1430, 2
  %vm1451 = vcmp.lt.s32.totalorder %v1430, 3
  %vm1452 = vcmp.lt.s32.totalorder %v1430, 4
  %v1453 = vsel %vm1449, %v1433, %v1436
  %v1454 = vsel %vm1452, %v1442, 2102212464
  %v1455 = vsel %vm1451, %v1439, %v1454
  %v1456 = vsel %vm1450, %v1453, %v1455
  %v1457 = vsel %vm1449, %v1436, %v1439
  %v1458 = vsel %vm1452, %v1445, 920167782
  %v1459 = vsel %vm1451, %v1442, %v1458
  %v1460 = vsel %vm1450, %v1457, %v1459
  %v1461 = vsel %vm1449, %v1439, %v1442
  %v1462 = vsel %vm1452, %v1448, 1326507024
  %v1463 = vsel %vm1451, %v1445, %v1462
  %v1464 = vsel %vm1450, %v1461, %v1463
  %v1465 = vshll.u32 %v1425, 8
  %v1466 = vmul.u32.u64.compose %v1465, %v1464
  %v1467 = vextract.low.u32 %v1466
  %v1468 = vextract.high.u32 %v1466
  %v1469 = vmul.u32.u64.compose %v1465, %v1460
  %v1470 = vextract.low.u32 %v1469
  %v1471 = vextract.high.u32 %v1469
  %v1472 = vmul.u32 %v1465, %v1456
  %v1473 = vadd.s32 %v1468, %v1470
  %vm1474 = vc.u32 %v1468, %v1470
  %v1475 = vadd.s32 %v1471, 1
  %v1476 = vsel %vm1474, %v1475, %v1471
  %v1477 = vadd.s32 %v1472, %v1476
  %v1478 = vadd.s32 %v1477, 536870912
  %v1479 = vshrl.u32 %v1478, 30
  %v1480 = vshll.u32 %v1479, 30
  %v1481 = vsub.s32 %v1477, %v1480
  %vm1482 = vcmp.lt.s32.totalorder %v1481, 0
  %v1483 = vsub.s32 0, %v1481
  %v1484 = vsel %vm1482, %v1483, %v1481
  %v1485 = vclz %v1484
  %v1486 = vsub.s32 %v1485, 2
  %vm1487 = vcmp.gt.s32.totalorder 0, %v1486
  %v1488 = vsel %vm1487, 0, %v1486
  %v1489 = vsub.s32 32, %v1488
  %v1490 = vshll.u32 %v1481, %v1488
  %v1491 = vshrl.u32 %v1473, %v1489
  %v1492 = vor.u32 %v1490, %v1491
  %v1493 = vsub.s32 4294967266, %v1488
  %v1494 = vadd.s32 %v1493, 127
  %v1495 = vshll.u32 %v1494, 23
  %v1496 = vor.u32 4788187, %v1495
  %v1497 = vand.u32 2147483647, %v1496
  %v1499 = vcvt.s32.f32 %v1492
  %v1500 = vmul.f32 %v1499, %v1497
  %v1501 = vxor.u32 %v1500, 2147483648
  %v1502 = vsel %vm1419, %v1501, %v1500
  %v1503 = vsub.s32 4, %v1479
  %v1504 = vsel %vm1419, %v1503, %v1479
  %v1505 = vsel %vm1418, %v571, %v1502
  %v1506 = vsel %vm1418, 0, %v1504
  %v1507 = vcosq.f32.pop %v1505
  %v1508 = vsinq.f32.pop %v1505
  %vm1509 = vweird.f32 %v571
  %v1510 = vadd.s32 %v1506, 3
  %v1511 = vand.u32 %v1510, 3
  %vm1512 = vcmp.lt.s32.totalorder %v1511, 2
  %vm1513 = vcmp.eq.s32.totalorder %v1511, 0
  %v1514 = vxor.u32 %v1508, 2147483648
  %v1515 = vsel %vm1513, %v1507, %v1514
  %vm1516 = vcmp.eq.s32.totalorder %v1511, 2
  %v1517 = vxor.u32 %v1507, 2147483648
  %v1518 = vsel %vm1516, %v1517, %v1508
  %v1519 = vsel %vm1512, %v1515, %v1518
  %v1520 = vsel %vm1509, nan, %v1519
  %v1521 = vand.u32 2147483647, %v572
  %vm1522 = vcmp.le.f32.partialorder %v1521, 0.7853982
  %vm1523 = vcmp.lt.s32.totalorder %v572, 0
  %v1524 = vand.u32 %v572, 2139095040
  %v1525 = vshrl.u32 %v1524, 23
  %v1526 = vsub.s32 %v1525, 127
  %v1527 = vand.u32 2147483647, %v572
  %v1528 = vand.u32 %v1527, 8388607
  %v1529 = vor.u32 %v1528, 8388608
  %v1530 = vsub.s32 0, %v1529
  %v1531 = vadd.s32 %v1526, 1
  %vm1532 = vcmp.gt.s32.totalorder %v1531, 0
  %v1533 = vsel %vm1532, %v1531, 0
  %v1534 = vshrl.u32 %v1533, 5
  %v1535 = vand.u32 %v1533, 31
  %v1536 = vsub.s32 32, %v1535
  %v1537 = vshrl.u32 683565275, %v1536
  %v1538 = vshll.u32 683565275, %v1535
  %v1539 = vshrl.u32 2475754826, %v1536
  %v1540 = vor.u32 %v1538, %v1539
  %v1541 = vshll.u32 2475754826, %v1535
  %v1542 = vshrl.u32 2131351028, %v1536
  %v1543 = vor.u32 %v1541, %v1542
  %v1544 = vshll.u32 2131351028, %v1535
  %v1545 = vshrl.u32 2102212464, %v1536
  %v1546 = vor.u32 %v1544, %v1545
  %v1547 = vshll.u32 2102212464, %v1535
  %v1548 = vshrl.u32 920167782, %v1536
  %v1549 = vor.u32 %v1547, %v1548
  %v1550 = vshll.u32 920167782, %v1535
  %v1551 = vshrl.u32 1326507024, %v1536
  %v1552 = vor.u32 %v1550, %v1551
  %vm1553 = vcmp.lt.s32.totalorder %v1534, 1
  %vm1554 = vcmp.lt.s32.totalorder %v1534, 2
  %vm1555 = vcmp.lt.s32.totalorder %v1534, 3
  %vm1556 = vcmp.lt.s32.totalorder %v1534, 4
  %v1557 = vsel %vm1553, %v1537, %v1540
  %v1558 = vsel %vm1556, %v1546, 2102212464
  %v1559 = vsel %vm1555, %v1543, %v1558
  %v1560 = vsel %vm1554, %v1557, %v1559
  %v1561 = vsel %vm1553, %v1540, %v1543
  %v1562 = vsel %vm1556, %v1549, 920167782
  %v1563 = vsel %vm1555, %v1546, %v1562
  %v1564 = vsel %vm1554, %v1561, %v1563
  %v1565 = vsel %vm1553, %v1543, %v1546
  %v1566 = vsel %vm1556, %v1552, 1326507024
  %v1567 = vsel %vm1555, %v1549, %v1566
  %v1568 = vsel %vm1554, %v1565, %v1567
  %v1569 = vshll.u32 %v1529, 8
  %v1570 = vmul.u32.u64.compose %v1569, %v1568
  %v1571 = vextract.low.u32 %v1570
  %v1572 = vextract.high.u32 %v1570
  %v1573 = vmul.u32.u64.compose %v1569, %v1564
  %v1574 = vextract.low.u32 %v1573
  %v1575 = vextract.high.u32 %v1573
  %v1576 = vmul.u32 %v1569, %v1560
  %v1577 = vadd.s32 %v1572, %v1574
  %vm1578 = vc.u32 %v1572, %v1574
  %v1579 = vadd.s32 %v1575, 1
  %v1580 = vsel %vm1578, %v1579, %v1575
  %v1581 = vadd.s32 %v1576, %v1580
  %v1582 = vadd.s32 %v1581, 536870912
  %v1583 = vshrl.u32 %v1582, 30
  %v1584 = vshll.u32 %v1583, 30
  %v1585 = vsub.s32 %v1581, %v1584
  %vm1586 = vcmp.lt.s32.totalorder %v1585, 0
  %v1587 = vsub.s32 0, %v1585
  %v1588 = vsel %vm1586, %v1587, %v1585
  %v1589 = vclz %v1588
  %v1590 = vsub.s32 %v1589, 2
  %vm1591 = vcmp.gt.s32.totalorder 0, %v1590
  %v1592 = vsel %vm1591, 0, %v1590
  %v1593 = vsub.s32 32, %v1592
  %v1594 = vshll.u32 %v1585, %v1592
  %v1595 = vshrl.u32 %v1577, %v1593
  %v1596 = vor.u32 %v1594, %v1595
  %v1597 = vsub.s32 4294967266, %v1592
  %v1598 = vadd.s32 %v1597, 127
  %v1599 = vshll.u32 %v1598, 23
  %v1600 = vor.u32 4788187, %v1599
  %v1601 = vand.u32 2147483647, %v1600
  %v1603 = vcvt.s32.f32 %v1596
  %v1604 = vmul.f32 %v1603, %v1601
  %v1605 = vxor.u32 %v1604, 2147483648
  %v1606 = vsel %vm1523, %v1605, %v1604
  %v1607 = vsub.s32 4, %v1583
  %v1608 = vsel %vm1523, %v1607, %v1583
  %v1609 = vsel %vm1522, %v572, %v1606
  %v1610 = vsel %vm1522, 0, %v1608
  %v1611 = vcosq.f32.pop %v1609
  %v1612 = vsinq.f32.pop %v1609
  %vm1613 = vweird.f32 %v572
  %v1614 = vadd.s32 %v1610, 3
  %v1615 = vand.u32 %v1614, 3
  %vm1616 = vcmp.lt.s32.totalorder %v1615, 2
  %vm1617 = vcmp.eq.s32.totalorder %v1615, 0
  %v1618 = vxor.u32 %v1612, 2147483648
  %v1619 = vsel %vm1617, %v1611, %v1618
  %vm1620 = vcmp.eq.s32.totalorder %v1615, 2
  %v1621 = vxor.u32 %v1611, 2147483648
  %v1622 = vsel %vm1620, %v1621, %v1612
  %v1623 = vsel %vm1616, %v1619, %v1622
  %v1624 = vsel %vm1613, nan, %v1623
  %v1625 = vand.u32 2147483647, %v573
  %vm1626 = vcmp.le.f32.partialorder %v1625, 0.7853982
  %vm1627 = vcmp.lt.s32.totalorder %v573, 0
  %v1628 = vand.u32 %v573, 2139095040
  %v1629 = vshrl.u32 %v1628, 23
  %v1630 = vsub.s32 %v1629, 127
  %v1631 = vand.u32 2147483647, %v573
  %v1632 = vand.u32 %v1631, 8388607
  %v1633 = vor.u32 %v1632, 8388608
  %v1634 = vsub.s32 0, %v1633
  %v1635 = vadd.s32 %v1630, 1
  %vm1636 = vcmp.gt.s32.totalorder %v1635, 0
  %v1637 = vsel %vm1636, %v1635, 0
  %v1638 = vshrl.u32 %v1637, 5
  %v1639 = vand.u32 %v1637, 31
  %v1640 = vsub.s32 32, %v1639
  %v1641 = vshrl.u32 683565275, %v1640
  %v1642 = vshll.u32 683565275, %v1639
  %v1643 = vshrl.u32 2475754826, %v1640
  %v1644 = vor.u32 %v1642, %v1643
  %v1645 = vshll.u32 2475754826, %v1639
  %v1646 = vshrl.u32 2131351028, %v1640
  %v1647 = vor.u32 %v1645, %v1646
  %v1648 = vshll.u32 2131351028, %v1639
  %v1649 = vshrl.u32 2102212464, %v1640
  %v1650 = vor.u32 %v1648, %v1649
  %v1651 = vshll.u32 2102212464, %v1639
  %v1652 = vshrl.u32 920167782, %v1640
  %v1653 = vor.u32 %v1651, %v1652
  %v1654 = vshll.u32 920167782, %v1639
  %v1655 = vshrl.u32 1326507024, %v1640
  %v1656 = vor.u32 %v1654, %v1655
  %vm1657 = vcmp.lt.s32.totalorder %v1638, 1
  %vm1658 = vcmp.lt.s32.totalorder %v1638, 2
  %vm1659 = vcmp.lt.s32.totalorder %v1638, 3
  %vm1660 = vcmp.lt.s32.totalorder %v1638, 4
  %v1661 = vsel %vm1657, %v1641, %v1644
  %v1662 = vsel %vm1660, %v1650, 2102212464
  %v1663 = vsel %vm1659, %v1647, %v1662
  %v1664 = vsel %vm1658, %v1661, %v1663
  %v1665 = vsel %vm1657, %v1644, %v1647
  %v1666 = vsel %vm1660, %v1653, 920167782
  %v1667 = vsel %vm1659, %v1650, %v1666
  %v1668 = vsel %vm1658, %v1665, %v1667
  %v1669 = vsel %vm1657, %v1647, %v1650
  %v1670 = vsel %vm1660, %v1656, 1326507024
  %v1671 = vsel %vm1659, %v1653, %v1670
  %v1672 = vsel %vm1658, %v1669, %v1671
  %v1673 = vshll.u32 %v1633, 8
  %v1674 = vmul.u32.u64.compose %v1673, %v1672
  %v1675 = vextract.low.u32 %v1674
  %v1676 = vextract.high.u32 %v1674
  %v1677 = vmul.u32.u64.compose %v1673, %v1668
  %v1678 = vextract.low.u32 %v1677
  %v1679 = vextract.high.u32 %v1677
  %v1680 = vmul.u32 %v1673, %v1664
  %v1681 = vadd.s32 %v1676, %v1678
  %vm1682 = vc.u32 %v1676, %v1678
  %v1683 = vadd.s32 %v1679, 1
  %v1684 = vsel %vm1682, %v1683, %v1679
  %v1685 = vadd.s32 %v1680, %v1684
  %v1686 = vadd.s32 %v1685, 536870912
  %v1687 = vshrl.u32 %v1686, 30
  %v1688 = vshll.u32 %v1687, 30
  %v1689 = vsub.s32 %v1685, %v1688
  %vm1690 = vcmp.lt.s32.totalorder %v1689, 0
  %v1691 = vsub.s32 0, %v1689
  %v1692 = vsel %vm1690, %v1691, %v1689
  %v1693 = vclz %v1692
  %v1694 = vsub.s32 %v1693, 2
  %vm1695 = vcmp.gt.s32.totalorder 0, %v1694
  %v1696 = vsel %vm1695, 0, %v1694
  %v1697 = vsub.s32 32, %v1696
  %v1698 = vshll.u32 %v1689, %v1696
  %v1699 = vshrl.u32 %v1681, %v1697
  %v1700 = vor.u32 %v1698, %v1699
  %v1701 = vsub.s32 4294967266, %v1696
  %v1702 = vadd.s32 %v1701, 127
  %v1703 = vshll.u32 %v1702, 23
  %v1704 = vor.u32 4788187, %v1703
  %v1705 = vand.u32 2147483647, %v1704
  %v1707 = vcvt.s32.f32 %v1700
  %v1708 = vmul.f32 %v1707, %v1705
  %v1709 = vxor.u32 %v1708, 2147483648
  %v1710 = vsel %vm1627, %v1709, %v1708
  %v1711 = vsub.s32 4, %v1687
  %v1712 = vsel %vm1627, %v1711, %v1687
  %v1713 = vsel %vm1626, %v573, %v1710
  %v1714 = vsel %vm1626, 0, %v1712
  %v1715 = vcosq.f32.pop %v1713
  %v1716 = vsinq.f32.pop %v1713
  %vm1717 = vweird.f32 %v573
  %v1718 = vadd.s32 %v1714, 3
  %v1719 = vand.u32 %v1718, 3
  %vm1720 = vcmp.lt.s32.totalorder %v1719, 2
  %vm1721 = vcmp.eq.s32.totalorder %v1719, 0
  %v1722 = vxor.u32 %v1716, 2147483648
  %v1723 = vsel %vm1721, %v1715, %v1722
  %vm1724 = vcmp.eq.s32.totalorder %v1719, 2
  %v1725 = vxor.u32 %v1715, 2147483648
  %v1726 = vsel %vm1724, %v1725, %v1716
  %v1727 = vsel %vm1720, %v1723, %v1726
  %v1728 = vsel %vm1717, nan, %v1727
  %v1729 = vand.u32 2147483647, %v574
  %vm1730 = vcmp.le.f32.partialorder %v1729, 0.7853982
  %vm1731 = vcmp.lt.s32.totalorder %v574, 0
  %v1732 = vand.u32 %v574, 2139095040
  %v1733 = vshrl.u32 %v1732, 23
  %v1734 = vsub.s32 %v1733, 127
  %v1735 = vand.u32 2147483647, %v574
  %v1736 = vand.u32 %v1735, 8388607
  %v1737 = vor.u32 %v1736, 8388608
  %v1738 = vsub.s32 0, %v1737
  %v1739 = vadd.s32 %v1734, 1
  %vm1740 = vcmp.gt.s32.totalorder %v1739, 0
  %v1741 = vsel %vm1740, %v1739, 0
  %v1742 = vshrl.u32 %v1741, 5
  %v1743 = vand.u32 %v1741, 31
  %v1744 = vsub.s32 32, %v1743
  %v1745 = vshrl.u32 683565275, %v1744
  %v1746 = vshll.u32 683565275, %v1743
  %v1747 = vshrl.u32 2475754826, %v1744
  %v1748 = vor.u32 %v1746, %v1747
  %v1749 = vshll.u32 2475754826, %v1743
  %v1750 = vshrl.u32 2131351028, %v1744
  %v1751 = vor.u32 %v1749, %v1750
  %v1752 = vshll.u32 2131351028, %v1743
  %v1753 = vshrl.u32 2102212464, %v1744
  %v1754 = vor.u32 %v1752, %v1753
  %v1755 = vshll.u32 2102212464, %v1743
  %v1756 = vshrl.u32 920167782, %v1744
  %v1757 = vor.u32 %v1755, %v1756
  %v1758 = vshll.u32 920167782, %v1743
  %v1759 = vshrl.u32 1326507024, %v1744
  %v1760 = vor.u32 %v1758, %v1759
  %vm1761 = vcmp.lt.s32.totalorder %v1742, 1
  %vm1762 = vcmp.lt.s32.totalorder %v1742, 2
  %vm1763 = vcmp.lt.s32.totalorder %v1742, 3
  %vm1764 = vcmp.lt.s32.totalorder %v1742, 4
  %v1765 = vsel %vm1761, %v1745, %v1748
  %v1766 = vsel %vm1764, %v1754, 2102212464
  %v1767 = vsel %vm1763, %v1751, %v1766
  %v1768 = vsel %vm1762, %v1765, %v1767
  %v1769 = vsel %vm1761, %v1748, %v1751
  %v1770 = vsel %vm1764, %v1757, 920167782
  %v1771 = vsel %vm1763, %v1754, %v1770
  %v1772 = vsel %vm1762, %v1769, %v1771
  %v1773 = vsel %vm1761, %v1751, %v1754
  %v1774 = vsel %vm1764, %v1760, 1326507024
  %v1775 = vsel %vm1763, %v1757, %v1774
  %v1776 = vsel %vm1762, %v1773, %v1775
  %v1777 = vshll.u32 %v1737, 8
  %v1778 = vmul.u32.u64.compose %v1777, %v1776
  %v1779 = vextract.low.u32 %v1778
  %v1780 = vextract.high.u32 %v1778
  %v1781 = vmul.u32.u64.compose %v1777, %v1772
  %v1782 = vextract.low.u32 %v1781
  %v1783 = vextract.high.u32 %v1781
  %v1784 = vmul.u32 %v1777, %v1768
  %v1785 = vadd.s32 %v1780, %v1782
  %vm1786 = vc.u32 %v1780, %v1782
  %v1787 = vadd.s32 %v1783, 1
  %v1788 = vsel %vm1786, %v1787, %v1783
  %v1789 = vadd.s32 %v1784, %v1788
  %v1790 = vadd.s32 %v1789, 536870912
  %v1791 = vshrl.u32 %v1790, 30
  %v1792 = vshll.u32 %v1791, 30
  %v1793 = vsub.s32 %v1789, %v1792
  %vm1794 = vcmp.lt.s32.totalorder %v1793, 0
  %v1795 = vsub.s32 0, %v1793
  %v1796 = vsel %vm1794, %v1795, %v1793
  %v1797 = vclz %v1796
  %v1798 = vsub.s32 %v1797, 2
  %vm1799 = vcmp.gt.s32.totalorder 0, %v1798
  %v1800 = vsel %vm1799, 0, %v1798
  %v1801 = vsub.s32 32, %v1800
  %v1802 = vshll.u32 %v1793, %v1800
  %v1803 = vshrl.u32 %v1785, %v1801
  %v1804 = vor.u32 %v1802, %v1803
  %v1805 = vsub.s32 4294967266, %v1800
  %v1806 = vadd.s32 %v1805, 127
  %v1807 = vshll.u32 %v1806, 23
  %v1808 = vor.u32 4788187, %v1807
  %v1809 = vand.u32 2147483647, %v1808
  %v1811 = vcvt.s32.f32 %v1804
  %v1812 = vmul.f32 %v1811, %v1809
  %v1813 = vxor.u32 %v1812, 2147483648
  %v1814 = vsel %vm1731, %v1813, %v1812
  %v1815 = vsub.s32 4, %v1791
  %v1816 = vsel %vm1731, %v1815, %v1791
  %v1817 = vsel %vm1730, %v574, %v1814
  %v1818 = vsel %vm1730, 0, %v1816
  %v1819 = vcosq.f32.pop %v1817
  %v1820 = vsinq.f32.pop %v1817
  %vm1821 = vweird.f32 %v574
  %v1822 = vadd.s32 %v1818, 3
  %v1823 = vand.u32 %v1822, 3
  %vm1824 = vcmp.lt.s32.totalorder %v1823, 2
  %vm1825 = vcmp.eq.s32.totalorder %v1823, 0
  %v1826 = vxor.u32 %v1820, 2147483648
  %v1827 = vsel %vm1825, %v1819, %v1826
  %vm1828 = vcmp.eq.s32.totalorder %v1823, 2
  %v1829 = vxor.u32 %v1819, 2147483648
  %v1830 = vsel %vm1828, %v1829, %v1820
  %v1831 = vsel %vm1824, %v1827, %v1830
  %v1832 = vsel %vm1821, nan, %v1831
  %v1833 = vand.u32 2147483647, %v575
  %vm1834 = vcmp.le.f32.partialorder %v1833, 0.7853982
  %vm1835 = vcmp.lt.s32.totalorder %v575, 0
  %v1836 = vand.u32 %v575, 2139095040
  %v1837 = vshrl.u32 %v1836, 23
  %v1838 = vsub.s32 %v1837, 127
  %v1839 = vand.u32 2147483647, %v575
  %v1840 = vand.u32 %v1839, 8388607
  %v1841 = vor.u32 %v1840, 8388608
  %v1842 = vsub.s32 0, %v1841
  %v1843 = vadd.s32 %v1838, 1
  %vm1844 = vcmp.gt.s32.totalorder %v1843, 0
  %v1845 = vsel %vm1844, %v1843, 0
  %v1846 = vshrl.u32 %v1845, 5
  %v1847 = vand.u32 %v1845, 31
  %v1848 = vsub.s32 32, %v1847
  %v1849 = vshrl.u32 683565275, %v1848
  %v1850 = vshll.u32 683565275, %v1847
  %v1851 = vshrl.u32 2475754826, %v1848
  %v1852 = vor.u32 %v1850, %v1851
  %v1853 = vshll.u32 2475754826, %v1847
  %v1854 = vshrl.u32 2131351028, %v1848
  %v1855 = vor.u32 %v1853, %v1854
  %v1856 = vshll.u32 2131351028, %v1847
  %v1857 = vshrl.u32 2102212464, %v1848
  %v1858 = vor.u32 %v1856, %v1857
  %v1859 = vshll.u32 2102212464, %v1847
  %v1860 = vshrl.u32 920167782, %v1848
  %v1861 = vor.u32 %v1859, %v1860
  %v1862 = vshll.u32 920167782, %v1847
  %v1863 = vshrl.u32 1326507024, %v1848
  %v1864 = vor.u32 %v1862, %v1863
  %vm1865 = vcmp.lt.s32.totalorder %v1846, 1
  %vm1866 = vcmp.lt.s32.totalorder %v1846, 2
  %vm1867 = vcmp.lt.s32.totalorder %v1846, 3
  %vm1868 = vcmp.lt.s32.totalorder %v1846, 4
  %v1869 = vsel %vm1865, %v1849, %v1852
  %v1870 = vsel %vm1868, %v1858, 2102212464
  %v1871 = vsel %vm1867, %v1855, %v1870
  %v1872 = vsel %vm1866, %v1869, %v1871
  %v1873 = vsel %vm1865, %v1852, %v1855
  %v1874 = vsel %vm1868, %v1861, 920167782
  %v1875 = vsel %vm1867, %v1858, %v1874
  %v1876 = vsel %vm1866, %v1873, %v1875
  %v1877 = vsel %vm1865, %v1855, %v1858
  %v1878 = vsel %vm1868, %v1864, 1326507024
  %v1879 = vsel %vm1867, %v1861, %v1878
  %v1880 = vsel %vm1866, %v1877, %v1879
  %v1881 = vshll.u32 %v1841, 8
  %v1882 = vmul.u32.u64.compose %v1881, %v1880
  %v1883 = vextract.low.u32 %v1882
  %v1884 = vextract.high.u32 %v1882
  %v1885 = vmul.u32.u64.compose %v1881, %v1876
  %v1886 = vextract.low.u32 %v1885
  %v1887 = vextract.high.u32 %v1885
  %v1888 = vmul.u32 %v1881, %v1872
  %v1889 = vadd.s32 %v1884, %v1886
  %vm1890 = vc.u32 %v1884, %v1886
  %v1891 = vadd.s32 %v1887, 1
  %v1892 = vsel %vm1890, %v1891, %v1887
  %v1893 = vadd.s32 %v1888, %v1892
  %v1894 = vadd.s32 %v1893, 536870912
  %v1895 = vshrl.u32 %v1894, 30
  %v1896 = vshll.u32 %v1895, 30
  %v1897 = vsub.s32 %v1893, %v1896
  %vm1898 = vcmp.lt.s32.totalorder %v1897, 0
  %v1899 = vsub.s32 0, %v1897
  %v1900 = vsel %vm1898, %v1899, %v1897
  %v1901 = vclz %v1900
  %v1902 = vsub.s32 %v1901, 2
  %vm1903 = vcmp.gt.s32.totalorder 0, %v1902
  %v1904 = vsel %vm1903, 0, %v1902
  %v1905 = vsub.s32 32, %v1904
  %v1906 = vshll.u32 %v1897, %v1904
  %v1907 = vshrl.u32 %v1889, %v1905
  %v1908 = vor.u32 %v1906, %v1907
  %v1909 = vsub.s32 4294967266, %v1904
  %v1910 = vadd.s32 %v1909, 127
  %v1911 = vshll.u32 %v1910, 23
  %v1912 = vor.u32 4788187, %v1911
  %v1913 = vand.u32 2147483647, %v1912
  %v1915 = vcvt.s32.f32 %v1908
  %v1916 = vmul.f32 %v1915, %v1913
  %v1917 = vxor.u32 %v1916, 2147483648
  %v1918 = vsel %vm1835, %v1917, %v1916
  %v1919 = vsub.s32 4, %v1895
  %v1920 = vsel %vm1835, %v1919, %v1895
  %v1921 = vsel %vm1834, %v575, %v1918
  %v1922 = vsel %vm1834, 0, %v1920
  %v1923 = vcosq.f32.pop %v1921
  %v1924 = vsinq.f32.pop %v1921
  %vm1925 = vweird.f32 %v575
  %v1926 = vadd.s32 %v1922, 3
  %v1927 = vand.u32 %v1926, 3
  %vm1928 = vcmp.lt.s32.totalorder %v1927, 2
  %vm1929 = vcmp.eq.s32.totalorder %v1927, 0
  %v1930 = vxor.u32 %v1924, 2147483648
  %v1931 = vsel %vm1929, %v1923, %v1930
  %vm1932 = vcmp.eq.s32.totalorder %v1927, 2
  %v1933 = vxor.u32 %v1923, 2147483648
  %v1934 = vsel %vm1932, %v1933, %v1924
  %v1935 = vsel %vm1928, %v1931, %v1934
  %v1936 = vsel %vm1925, nan, %v1935
  %v1937 = vand.u32 2147483647, %v576
  %vm1938 = vcmp.le.f32.partialorder %v1937, 0.7853982
  %vm1939 = vcmp.lt.s32.totalorder %v576, 0
  %v1940 = vand.u32 %v576, 2139095040
  %v1941 = vshrl.u32 %v1940, 23
  %v1942 = vsub.s32 %v1941, 127
  %v1943 = vand.u32 2147483647, %v576
  %v1944 = vand.u32 %v1943, 8388607
  %v1945 = vor.u32 %v1944, 8388608
  %v1946 = vsub.s32 0, %v1945
  %v1947 = vadd.s32 %v1942, 1
  %vm1948 = vcmp.gt.s32.totalorder %v1947, 0
  %v1949 = vsel %vm1948, %v1947, 0
  %v1950 = vshrl.u32 %v1949, 5
  %v1951 = vand.u32 %v1949, 31
  %v1952 = vsub.s32 32, %v1951
  %v1953 = vshrl.u32 683565275, %v1952
  %v1954 = vshll.u32 683565275, %v1951
  %v1955 = vshrl.u32 2475754826, %v1952
  %v1956 = vor.u32 %v1954, %v1955
  %v1957 = vshll.u32 2475754826, %v1951
  %v1958 = vshrl.u32 2131351028, %v1952
  %v1959 = vor.u32 %v1957, %v1958
  %v1960 = vshll.u32 2131351028, %v1951
  %v1961 = vshrl.u32 2102212464, %v1952
  %v1962 = vor.u32 %v1960, %v1961
  %v1963 = vshll.u32 2102212464, %v1951
  %v1964 = vshrl.u32 920167782, %v1952
  %v1965 = vor.u32 %v1963, %v1964
  %v1966 = vshll.u32 920167782, %v1951
  %v1967 = vshrl.u32 1326507024, %v1952
  %v1968 = vor.u32 %v1966, %v1967
  %vm1969 = vcmp.lt.s32.totalorder %v1950, 1
  %vm1970 = vcmp.lt.s32.totalorder %v1950, 2
  %vm1971 = vcmp.lt.s32.totalorder %v1950, 3
  %vm1972 = vcmp.lt.s32.totalorder %v1950, 4
  %v1973 = vsel %vm1969, %v1953, %v1956
  %v1974 = vsel %vm1972, %v1962, 2102212464
  %v1975 = vsel %vm1971, %v1959, %v1974
  %v1976 = vsel %vm1970, %v1973, %v1975
  %v1977 = vsel %vm1969, %v1956, %v1959
  %v1978 = vsel %vm1972, %v1965, 920167782
  %v1979 = vsel %vm1971, %v1962, %v1978
  %v1980 = vsel %vm1970, %v1977, %v1979
  %v1981 = vsel %vm1969, %v1959, %v1962
  %v1982 = vsel %vm1972, %v1968, 1326507024
  %v1983 = vsel %vm1971, %v1965, %v1982
  %v1984 = vsel %vm1970, %v1981, %v1983
  %v1985 = vshll.u32 %v1945, 8
  %v1986 = vmul.u32.u64.compose %v1985, %v1984
  %v1987 = vextract.low.u32 %v1986
  %v1988 = vextract.high.u32 %v1986
  %v1989 = vmul.u32.u64.compose %v1985, %v1980
  %v1990 = vextract.low.u32 %v1989
  %v1991 = vextract.high.u32 %v1989
  %v1992 = vmul.u32 %v1985, %v1976
  %v1993 = vadd.s32 %v1988, %v1990
  %vm1994 = vc.u32 %v1988, %v1990
  %v1995 = vadd.s32 %v1991, 1
  %v1996 = vsel %vm1994, %v1995, %v1991
  %v1997 = vadd.s32 %v1992, %v1996
  %v1998 = vadd.s32 %v1997, 536870912
  %v1999 = vshrl.u32 %v1998, 30
  %v2000 = vshll.u32 %v1999, 30
  %v2001 = vsub.s32 %v1997, %v2000
  %vm2002 = vcmp.lt.s32.totalorder %v2001, 0
  %v2003 = vsub.s32 0, %v2001
  %v2004 = vsel %vm2002, %v2003, %v2001
  %v2005 = vclz %v2004
  %v2006 = vsub.s32 %v2005, 2
  %vm2007 = vcmp.gt.s32.totalorder 0, %v2006
  %v2008 = vsel %vm2007, 0, %v2006
  %v2009 = vsub.s32 32, %v2008
  %v2010 = vshll.u32 %v2001, %v2008
  %v2011 = vshrl.u32 %v1993, %v2009
  %v2012 = vor.u32 %v2010, %v2011
  %v2013 = vsub.s32 4294967266, %v2008
  %v2014 = vadd.s32 %v2013, 127
  %v2015 = vshll.u32 %v2014, 23
  %v2016 = vor.u32 4788187, %v2015
  %v2017 = vand.u32 2147483647, %v2016
  %v2019 = vcvt.s32.f32 %v2012
  %v2020 = vmul.f32 %v2019, %v2017
  %v2021 = vxor.u32 %v2020, 2147483648
  %v2022 = vsel %vm1939, %v2021, %v2020
  %v2023 = vsub.s32 4, %v1999
  %v2024 = vsel %vm1939, %v2023, %v1999
  %v2025 = vsel %vm1938, %v576, %v2022
  %v2026 = vsel %vm1938, 0, %v2024
  %v2027 = vcosq.f32.pop %v2025
  %v2028 = vsinq.f32.pop %v2025
  %vm2029 = vweird.f32 %v576
  %v2030 = vadd.s32 %v2026, 3
  %v2031 = vand.u32 %v2030, 3
  %vm2032 = vcmp.lt.s32.totalorder %v2031, 2
  %vm2033 = vcmp.eq.s32.totalorder %v2031, 0
  %v2034 = vxor.u32 %v2028, 2147483648
  %v2035 = vsel %vm2033, %v2027, %v2034
  %vm2036 = vcmp.eq.s32.totalorder %v2031, 2
  %v2037 = vxor.u32 %v2027, 2147483648
  %v2038 = vsel %vm2036, %v2037, %v2028
  %v2039 = vsel %vm2032, %v2035, %v2038
  %v2040 = vsel %vm2029, nan, %v2039
  %v2041 = vand.u32 2147483647, %v577
  %vm2042 = vcmp.le.f32.partialorder %v2041, 0.7853982
  %vm2043 = vcmp.lt.s32.totalorder %v577, 0
  %v2044 = vand.u32 %v577, 2139095040
  %v2045 = vshrl.u32 %v2044, 23
  %v2046 = vsub.s32 %v2045, 127
  %v2047 = vand.u32 2147483647, %v577
  %v2048 = vand.u32 %v2047, 8388607
  %v2049 = vor.u32 %v2048, 8388608
  %v2050 = vsub.s32 0, %v2049
  %v2051 = vadd.s32 %v2046, 1
  %vm2052 = vcmp.gt.s32.totalorder %v2051, 0
  %v2053 = vsel %vm2052, %v2051, 0
  %v2054 = vshrl.u32 %v2053, 5
  %v2055 = vand.u32 %v2053, 31
  %v2056 = vsub.s32 32, %v2055
  %v2057 = vshrl.u32 683565275, %v2056
  %v2058 = vshll.u32 683565275, %v2055
  %v2059 = vshrl.u32 2475754826, %v2056
  %v2060 = vor.u32 %v2058, %v2059
  %v2061 = vshll.u32 2475754826, %v2055
  %v2062 = vshrl.u32 2131351028, %v2056
  %v2063 = vor.u32 %v2061, %v2062
  %v2064 = vshll.u32 2131351028, %v2055
  %v2065 = vshrl.u32 2102212464, %v2056
  %v2066 = vor.u32 %v2064, %v2065
  %v2067 = vshll.u32 2102212464, %v2055
  %v2068 = vshrl.u32 920167782, %v2056
  %v2069 = vor.u32 %v2067, %v2068
  %v2070 = vshll.u32 920167782, %v2055
  %v2071 = vshrl.u32 1326507024, %v2056
  %v2072 = vor.u32 %v2070, %v2071
  %vm2073 = vcmp.lt.s32.totalorder %v2054, 1
  %vm2074 = vcmp.lt.s32.totalorder %v2054, 2
  %vm2075 = vcmp.lt.s32.totalorder %v2054, 3
  %vm2076 = vcmp.lt.s32.totalorder %v2054, 4
  %v2077 = vsel %vm2073, %v2057, %v2060
  %v2078 = vsel %vm2076, %v2066, 2102212464
  %v2079 = vsel %vm2075, %v2063, %v2078
  %v2080 = vsel %vm2074, %v2077, %v2079
  %v2081 = vsel %vm2073, %v2060, %v2063
  %v2082 = vsel %vm2076, %v2069, 920167782
  %v2083 = vsel %vm2075, %v2066, %v2082
  %v2084 = vsel %vm2074, %v2081, %v2083
  %v2085 = vsel %vm2073, %v2063, %v2066
  %v2086 = vsel %vm2076, %v2072, 1326507024
  %v2087 = vsel %vm2075, %v2069, %v2086
  %v2088 = vsel %vm2074, %v2085, %v2087
  %v2089 = vshll.u32 %v2049, 8
  %v2090 = vmul.u32.u64.compose %v2089, %v2088
  %v2091 = vextract.low.u32 %v2090
  %v2092 = vextract.high.u32 %v2090
  %v2093 = vmul.u32.u64.compose %v2089, %v2084
  %v2094 = vextract.low.u32 %v2093
  %v2095 = vextract.high.u32 %v2093
  %v2096 = vmul.u32 %v2089, %v2080
  %v2097 = vadd.s32 %v2092, %v2094
  %vm2098 = vc.u32 %v2092, %v2094
  %v2099 = vadd.s32 %v2095, 1
  %v2100 = vsel %vm2098, %v2099, %v2095
  %v2101 = vadd.s32 %v2096, %v2100
  %v2102 = vadd.s32 %v2101, 536870912
  %v2103 = vshrl.u32 %v2102, 30
  %v2104 = vshll.u32 %v2103, 30
  %v2105 = vsub.s32 %v2101, %v2104
  %vm2106 = vcmp.lt.s32.totalorder %v2105, 0
  %v2107 = vsub.s32 0, %v2105
  %v2108 = vsel %vm2106, %v2107, %v2105
  %v2109 = vclz %v2108
  %v2110 = vsub.s32 %v2109, 2
  %vm2111 = vcmp.gt.s32.totalorder 0, %v2110
  %v2112 = vsel %vm2111, 0, %v2110
  %v2113 = vsub.s32 32, %v2112
  %v2114 = vshll.u32 %v2105, %v2112
  %v2115 = vshrl.u32 %v2097, %v2113
  %v2116 = vor.u32 %v2114, %v2115
  %v2117 = vsub.s32 4294967266, %v2112
  %v2118 = vadd.s32 %v2117, 127
  %v2119 = vshll.u32 %v2118, 23
  %v2120 = vor.u32 4788187, %v2119
  %v2121 = vand.u32 2147483647, %v2120
  %v2123 = vcvt.s32.f32 %v2116
  %v2124 = vmul.f32 %v2123, %v2121
  %v2125 = vxor.u32 %v2124, 2147483648
  %v2126 = vsel %vm2043, %v2125, %v2124
  %v2127 = vsub.s32 4, %v2103
  %v2128 = vsel %vm2043, %v2127, %v2103
  %v2129 = vsel %vm2042, %v577, %v2126
  %v2130 = vsel %vm2042, 0, %v2128
  %v2131 = vcosq.f32.pop %v2129
  %v2132 = vsinq.f32.pop %v2129
  %vm2133 = vweird.f32 %v577
  %v2134 = vadd.s32 %v2130, 3
  %v2135 = vand.u32 %v2134, 3
  %vm2136 = vcmp.lt.s32.totalorder %v2135, 2
  %vm2137 = vcmp.eq.s32.totalorder %v2135, 0
  %v2138 = vxor.u32 %v2132, 2147483648
  %v2139 = vsel %vm2137, %v2131, %v2138
  %vm2140 = vcmp.eq.s32.totalorder %v2135, 2
  %v2141 = vxor.u32 %v2131, 2147483648
  %v2142 = vsel %vm2140, %v2141, %v2132
  %v2143 = vsel %vm2136, %v2139, %v2142
  %v2144 = vsel %vm2133, nan, %v2143
  %v2145 = vand.u32 2147483647, %v578
  %vm2146 = vcmp.le.f32.partialorder %v2145, 0.7853982
  %vm2147 = vcmp.lt.s32.totalorder %v578, 0
  %v2148 = vand.u32 %v578, 2139095040
  %v2149 = vshrl.u32 %v2148, 23
  %v2150 = vsub.s32 %v2149, 127
  %v2151 = vand.u32 2147483647, %v578
  %v2152 = vand.u32 %v2151, 8388607
  %v2153 = vor.u32 %v2152, 8388608
  %v2154 = vsub.s32 0, %v2153
  %v2155 = vadd.s32 %v2150, 1
  %vm2156 = vcmp.gt.s32.totalorder %v2155, 0
  %v2157 = vsel %vm2156, %v2155, 0
  %v2158 = vshrl.u32 %v2157, 5
  %v2159 = vand.u32 %v2157, 31
  %v2160 = vsub.s32 32, %v2159
  %v2161 = vshrl.u32 683565275, %v2160
  %v2162 = vshll.u32 683565275, %v2159
  %v2163 = vshrl.u32 2475754826, %v2160
  %v2164 = vor.u32 %v2162, %v2163
  %v2165 = vshll.u32 2475754826, %v2159
  %v2166 = vshrl.u32 2131351028, %v2160
  %v2167 = vor.u32 %v2165, %v2166
  %v2168 = vshll.u32 2131351028, %v2159
  %v2169 = vshrl.u32 2102212464, %v2160
  %v2170 = vor.u32 %v2168, %v2169
  %v2171 = vshll.u32 2102212464, %v2159
  %v2172 = vshrl.u32 920167782, %v2160
  %v2173 = vor.u32 %v2171, %v2172
  %v2174 = vshll.u32 920167782, %v2159
  %v2175 = vshrl.u32 1326507024, %v2160
  %v2176 = vor.u32 %v2174, %v2175
  %vm2177 = vcmp.lt.s32.totalorder %v2158, 1
  %vm2178 = vcmp.lt.s32.totalorder %v2158, 2
  %vm2179 = vcmp.lt.s32.totalorder %v2158, 3
  %vm2180 = vcmp.lt.s32.totalorder %v2158, 4
  %v2181 = vsel %vm2177, %v2161, %v2164
  %v2182 = vsel %vm2180, %v2170, 2102212464
  %v2183 = vsel %vm2179, %v2167, %v2182
  %v2184 = vsel %vm2178, %v2181, %v2183
  %v2185 = vsel %vm2177, %v2164, %v2167
  %v2186 = vsel %vm2180, %v2173, 920167782
  %v2187 = vsel %vm2179, %v2170, %v2186
  %v2188 = vsel %vm2178, %v2185, %v2187
  %v2189 = vsel %vm2177, %v2167, %v2170
  %v2190 = vsel %vm2180, %v2176, 1326507024
  %v2191 = vsel %vm2179, %v2173, %v2190
  %v2192 = vsel %vm2178, %v2189, %v2191
  %v2193 = vshll.u32 %v2153, 8
  %v2194 = vmul.u32.u64.compose %v2193, %v2192
  %v2195 = vextract.low.u32 %v2194
  %v2196 = vextract.high.u32 %v2194
  %v2197 = vmul.u32.u64.compose %v2193, %v2188
  %v2198 = vextract.low.u32 %v2197
  %v2199 = vextract.high.u32 %v2197
  %v2200 = vmul.u32 %v2193, %v2184
  %v2201 = vadd.s32 %v2196, %v2198
  %vm2202 = vc.u32 %v2196, %v2198
  %v2203 = vadd.s32 %v2199, 1
  %v2204 = vsel %vm2202, %v2203, %v2199
  %v2205 = vadd.s32 %v2200, %v2204
  %v2206 = vadd.s32 %v2205, 536870912
  %v2207 = vshrl.u32 %v2206, 30
  %v2208 = vshll.u32 %v2207, 30
  %v2209 = vsub.s32 %v2205, %v2208
  %vm2210 = vcmp.lt.s32.totalorder %v2209, 0
  %v2211 = vsub.s32 0, %v2209
  %v2212 = vsel %vm2210, %v2211, %v2209
  %v2213 = vclz %v2212
  %v2214 = vsub.s32 %v2213, 2
  %vm2215 = vcmp.gt.s32.totalorder 0, %v2214
  %v2216 = vsel %vm2215, 0, %v2214
  %v2217 = vsub.s32 32, %v2216
  %v2218 = vshll.u32 %v2209, %v2216
  %v2219 = vshrl.u32 %v2201, %v2217
  %v2220 = vor.u32 %v2218, %v2219
  %v2221 = vsub.s32 4294967266, %v2216
  %v2222 = vadd.s32 %v2221, 127
  %v2223 = vshll.u32 %v2222, 23
  %v2224 = vor.u32 4788187, %v2223
  %v2225 = vand.u32 2147483647, %v2224
  %v2227 = vcvt.s32.f32 %v2220
  %v2228 = vmul.f32 %v2227, %v2225
  %v2229 = vxor.u32 %v2228, 2147483648
  %v2230 = vsel %vm2147, %v2229, %v2228
  %v2231 = vsub.s32 4, %v2207
  %v2232 = vsel %vm2147, %v2231, %v2207
  %v2233 = vsel %vm2146, %v578, %v2230
  %v2234 = vsel %vm2146, 0, %v2232
  %v2235 = vcosq.f32.pop %v2233
  %v2236 = vsinq.f32.pop %v2233
  %vm2237 = vweird.f32 %v578
  %v2238 = vadd.s32 %v2234, 3
  %v2239 = vand.u32 %v2238, 3
  %vm2240 = vcmp.lt.s32.totalorder %v2239, 2
  %vm2241 = vcmp.eq.s32.totalorder %v2239, 0
  %v2242 = vxor.u32 %v2236, 2147483648
  %v2243 = vsel %vm2241, %v2235, %v2242
  %vm2244 = vcmp.eq.s32.totalorder %v2239, 2
  %v2245 = vxor.u32 %v2235, 2147483648
  %v2246 = vsel %vm2244, %v2245, %v2236
  %v2247 = vsel %vm2240, %v2243, %v2246
  %v2248 = vsel %vm2237, nan, %v2247
  %v2249 = vld [vmem:[%s3] sm:$0xf]
  %v2250 = vpack.c.bf16 %v792, %v688
  %v2251 = vpack.c.bf16 %v1000, %v896
  %v2252 = vpack.c.bf16 %v1208, %v1104
  %v2253 = vpack.c.bf16 %v1416, %v1312
  %v2254 = vpack.c.bf16 %v1624, %v1520
  %v2255 = vpack.c.bf16 %v1832, %v1728
  %v2256 = vpack.c.bf16 %v2040, %v1936
  %v2257 = vpack.c.bf16 %v2248, %v2144
  %2258 = vmatprep.subr.bf16.mxu0 0
  %2259 = vmatpush1.bf16.msra.mxu0 %v2257
  %2260 = vmatprep.subr.bf16.mxu0 0
  %2261 = vmatpush1.bf16.msra.mxu0 %v2256
  %2262 = vmatprep.subr.bf16.mxu0 0
  %2263 = vmatpush1.bf16.msra.mxu0 %v2255
  %2264 = vmatprep.subr.bf16.mxu0 0
  %2265 = vmatpush1.bf16.msra.mxu0 %v2254
  %2266 = vmatprep.subr.bf16.mxu0 0
  %2267 = vmatpush1.bf16.msra.mxu0 %v2253
  %2268 = vmatprep.subr.bf16.mxu0 0
  %2269 = vmatpush1.bf16.msra.mxu0 %v2252
  %2270 = vmatprep.subr.bf16.mxu0 0
  %2271 = vmatpush1.bf16.msra.mxu0 %v2251
  %2272 = vmatprep.subr.bf16.mxu0 0
  %2273 = vmatpush1.bf16.msra.mxu0 %v2250
  %2274 = vmatprep.subr.bf16.mxu0 0
  %2275 = vmatpush2.bf16.msra.mxu0 0
  %2276 = vmatprep.subr.bf16.mxu0 0
  %2277 = vmatpush2.bf16.msra.mxu0 0
  %2278 = vmatprep.subr.bf16.mxu0 0
  %2279 = vmatpush2.bf16.msra.mxu0 0
  %2280 = vmatprep.subr.bf16.mxu0 0
  %2281 = vmatpush2.bf16.msra.mxu0 0
  %2282 = vmatprep.subr.bf16.mxu0 0
  %2283 = vmatpush2.bf16.msra.mxu0 0
  %2284 = vmatprep.subr.bf16.mxu0 0
  %2285 = vmatpush2.bf16.msra.mxu0 0
  %2286 = vmatprep.subr.bf16.mxu0 0
  %2287 = vmatpush2.bf16.msra.mxu0 0
  %2288 = vmatprep.subr.bf16.mxu0 0
  %2289 = vmatpush2.bf16.msra.mxu0 0
  %2290 = vmatprep.mubr.bf16.mxu0 0
  %2291 = vmatmul.mubr.bf16.gmra.mxu0 %v2249
  %v2292 = vpop.f32.mrf.mxu0
  %v2293 = vadd.f32 0.0, %v2292
  %v2294 = vpop.f32.mrf.mxu0
  %v2295 = vpop.f32.mrf.mxu0
  %v2296 = vpop.f32.mrf.mxu0
  %2297 = vdwg.mxu0
  %v2298 = vadd.f32 %v584, %v2293
  %v2299 = vrot.slane %v2298, 4
  %v2300 = vmax.f32 %v2298, %v2299
  %v2301 = vrot.slane %v2300, 2
  %v2302 = vmax.f32 %v2300, %v2301
  %v2303 = vrot.slane %v2302, 1
  %v2304 = vmax.f32 %v2302, %v2303
  %v2305 = vsub.f32 %v2298, %v2304
  %v2306 = vmul.f32 %v2305, 1.442695
  %v2307 = vpow.pop %v2306
  %v2308 = vrot.slane %v2307, 4
  %v2309 = vadd.f32 %v2307, %v2308
  %v2310 = vrot.slane %v2309, 2
  %v2311 = vadd.f32 %v2309, %v2310
  %v2312 = vrot.slane %v2311, 1
  %v2313 = vadd.f32 %v2311, %v2312
  %v2314 = vrcp.pop %v2313
  %v2315 = vmul.f32 %v2307, %v2314
  %2316 = vst [vmem:[%s6] sm:$0xff] %v2315
  // Predicated region
  $region26: #{model_forward.1} parent=0 // pred_check
    _
  $region27: #{model_forward.1} parent=0 // pred_check_branch
    %2318 = sbr.rel (0) target = $region29
  $region28: #{model_forward.1} parent=0 // pred_region
    _
  $region29: #{model_forward.1} parent=0 // pred_fallthru
    _
  // Predicated region
  $region30: #{model_forward.1} parent=0 // pred_check
    _
  $region31: #{model_forward.1} parent=0 // pred_check_branch
    %2320 = sbr.rel (0) target = $region33
  $region32: #{model_forward.1} parent=0 // pred_region
    _
  $region33: #{model_forward.1} parent=0 // pred_fallthru
    _

</llo_original>
